<compile_context>
chip_gen: v5e
topology: v5e:2x2
jax: 0.10.0
libtpu: 0.0.40
codegen_flags: <defaults>
</compile_context>

<pallas_src>
import functools

import jax
import jax.numpy as jnp
from jax.experimental import pallas as pl
from jax.experimental.pallas import tpu as pltpu

_LANE = 128
_SUBLANE = 8


def _round_up(x, m):
    return ((x + m - 1) // m) * m


def _actor_kernel(x_ref,
                  w1_ref, b1_ref,
                  w2_ref, b2_ref,
                  w3_ref, b3_ref,
                  w4_ref, b4_ref,
                  w5_ref, b5_ref,
                  o_ref,
                  *, max_action, act_dtype):
    # Weights are bf16; activations are cast to the weight dtype only at the
    # MXU input, accumulation is f32 (preferred_element_type).  Bias-add and
    # ReLU run in f32 on the accumulator; the result is stored in `act_dtype`
    # (f32 on v5e, optionally bf16 on v6e/v7x) for the next layer.
    h = x_ref[...]

    def dense(h, w_ref, b_ref):
        y = jnp.dot(h.astype(w_ref.dtype), w_ref[...],
                    preferred_element_type=jnp.float32)
        return y + b_ref[...]          # [1, out] bias: implicit in-vreg broadcast

    def dense_relu(h, w_ref, b_ref):
        return jnp.maximum(dense(h, w_ref, b_ref), 0.0).astype(act_dtype)

    h = dense_relu(h, w1_ref, b1_ref)
    h = dense_relu(h, w2_ref, b2_ref)
    h = dense_relu(h, w3_ref, b3_ref)
    h = dense_relu(h, w4_ref, b4_ref)
    h = dense(h, w5_ref, b5_ref)                       # f32
    o_ref[...] = (max_action * jnp.tanh(h)).astype(o_ref.dtype)


def init_actor_params(key, state_dim, action_dim):
    """Unpadded f32 params matching nn.Linear init; weights stored [in, out]."""
    dims = [state_dim, 500, 400, 300, 300, action_dim]
    params = []
    for i in range(5):
        fan_in, fan_out = dims[i], dims[i + 1]
        key, kw, kb = jax.random.split(key, 3)
        bound = float(fan_in) ** -0.5
        w = jax.random.uniform(kw, (fan_in, fan_out), jnp.float32, -bound, bound)
        b = jax.random.uniform(kb, (1, fan_out), jnp.float32, -bound, bound)
        params.append((w, b))
    return params


def pad_actor_params(params, weight_dtype=jnp.bfloat16):
    """Zero-pad dims for TPU tiling and cast weights to `weight_dtype`.

    Layer 0's input dim is padded only to the 8-sublane minimum (not 128);
    every output dim (and hence the next layer's input dim) is padded to a
    multiple of 128 for lane-dense MXU tiles.
    """
    padded = []
    prev_out_pad = None
    for idx, (w, b) in enumerate(params):
        fi, fo = w.shape
        fi_p = _round_up(fi, _SUBLANE) if idx == 0 else prev_out_pad
        fo_p = _round_up(fo, _LANE)
        wp = (jnp.zeros((fi_p, fo_p), jnp.float32)
              .at[:fi, :fo].set(w).astype(weight_dtype))
        bp = jnp.zeros((1, fo_p), jnp.float32).at[:, :fo].set(b)
        padded.append((wp, bp))
        prev_out_pad = fo_p
    return padded


def actor_forward(x, padded_params, action_dim, max_action, *,
                  batch_tile=512, min_grid_tiles=1,
                  activation_dtype=jnp.float32):
    """x: [B, state_dim] f32.  padded_params: output of pad_actor_params().

    min_grid_tiles: set to 2 for large-batch use on v7x so its two TensorCores
    both get grid steps; leave at 1 on single-TC v5e/v6e (fewer, bigger tiles).
    activation_dtype: jnp.bfloat16 is recommended on v6e/v7x; keep f32 on v5e.
    """
    batch, state_dim = x.shape
    in_pad = padded_params[0][0].shape[0]      # state dim padded to sublane (8)
    out_pad = padded_params[-1][0].shape[1]    # action dim padded to lane (128)

    # Balanced batch tiling.
    n_tiles = max(pl.cdiv(batch, batch_tile), min_grid_tiles)
    if n_tiles <= 1:
        tb = batch                              # full-dim block: no row padding
        batch_pad = batch
    else:
        tb = _round_up(pl.cdiv(batch, n_tiles), _SUBLANE)
        batch_pad = n_tiles * tb

    # Only materialize a padded copy of x when actually required.
    if batch_pad != batch or in_pad != state_dim:
        xp = jnp.zeros((batch_pad, in_pad), x.dtype).at[:batch, :state_dim].set(x)
    else:
        xp = x

    flat_args = [xp]
    in_specs = [pl.BlockSpec((tb, in_pad), lambda i: (i, 0))]
    for w, b in padded_params:
        flat_args.extend([w, b])
        # Constant index maps: weights/biases are DMA'd once per call and stay
        # VMEM-resident across grid steps.
        in_specs.append(pl.BlockSpec(w.shape, lambda i: (0, 0)))
        in_specs.append(pl.BlockSpec(b.shape, lambda i: (0, 0)))

    kernel = functools.partial(_actor_kernel,
                               max_action=float(max_action),
                               act_dtype=activation_dtype)

    out = pl.pallas_call(
        kernel,
        out_shape=jax.ShapeDtypeStruct((batch_pad, out_pad), jnp.float32),
        grid=(batch_pad // tb,),
        in_specs=in_specs,
        out_specs=pl.BlockSpec((tb, out_pad), lambda i: (i, 0)),
        compiler_params=pltpu.CompilerParams(
            dimension_semantics=("parallel",)),   # v7x: shard batch over 2 TCs
    )(*flat_args)

    return out[:batch, :action_dim]


if __name__ == "__main__":
    key = jax.random.PRNGKey(0)
    key, kx = jax.random.split(key)

    batch = 2
    state_dim = 8
    action_dim = 4
    max_action = 2.0

    x = jax.random.normal(kx, (batch, state_dim), dtype=jnp.float32)
    params = init_actor_params(key, state_dim, action_dim)
    padded_params = pad_actor_params(params)

    out = actor_forward(x, padded_params, action_dim, max_action)
    out = jax.block_until_ready(out)
    assert out.shape == (batch, action_dim)

    # Reference 1: same arithmetic as the kernel (bf16 weights/inputs at the
    # dot, f32 accumulation) -> should match tightly.
    ref_bf = x
    for i, (w, b) in enumerate(params):
        h = jnp.dot(ref_bf.astype(jnp.bfloat16), w.astype(jnp.bfloat16),
                    preferred_element_type=jnp.float32) + b
        ref_bf = jnp.maximum(h, 0.0) if i < 4 else max_action * jnp.tanh(h)

    # Reference 2: pure-f32 module semantics -> coarse check (bf16 weights).
    ref_f32 = x
    for i, (w, b) in enumerate(params):
        h = ref_f32 @ w + b
        ref_f32 = jnp.maximum(h, 0.0) if i < 4 else max_action * jnp.tanh(h)

    assert jnp.allclose(out, ref_bf, atol=2e-3), "mismatch vs bf16-matched reference"
    assert jnp.allclose(out, ref_f32, atol=5e-2), "mismatch vs f32 reference"
    print("KERNEL_OK")
</pallas_src>

<mosaic_0001>
module attributes {stable_mosaic.version = 11 : i64} {
  func.func @_actor_kernel(%arg0: i32, %arg1: memref<2x8xf32, #tpu.memory_space<vmem>>, %arg2: memref<8x512xbf16, #tpu.memory_space<vmem>>, %arg3: memref<1x512xf32, #tpu.memory_space<vmem>>, %arg4: memref<512x512xbf16, #tpu.memory_space<vmem>>, %arg5: memref<1x512xf32, #tpu.memory_space<vmem>>, %arg6: memref<512x384xbf16, #tpu.memory_space<vmem>>, %arg7: memref<1x384xf32, #tpu.memory_space<vmem>>, %arg8: memref<384x384xbf16, #tpu.memory_space<vmem>>, %arg9: memref<1x384xf32, #tpu.memory_space<vmem>>, %arg10: memref<384x128xbf16, #tpu.memory_space<vmem>>, %arg11: memref<1x128xf32, #tpu.memory_space<vmem>>, %arg12: memref<2x128xf32, #tpu.memory_space<vmem>>) attributes {dimension_semantics = [#tpu.dimension_semantics<parallel>], iteration_bounds = array<i64: 1>, scalar_prefetch = 0 : i64, scratch_operands = 0 : i64, tpu.core_type = #tpu.core_type<tc>, window_params = [{transform_indices = @transform_0, window_bounds = array<i64: 2, 8>}, {pipeline_mode = #tpu.pipeline_mode<synchronous>, transform_indices = @transform_1, window_bounds = array<i64: 8, 512>}, {pipeline_mode = #tpu.pipeline_mode<synchronous>, transform_indices = @transform_2, window_bounds = array<i64: 1, 512>}, {pipeline_mode = #tpu.pipeline_mode<synchronous>, transform_indices = @transform_3, window_bounds = array<i64: 512, 512>}, {pipeline_mode = #tpu.pipeline_mode<synchronous>, transform_indices = @transform_4, window_bounds = array<i64: 1, 512>}, {pipeline_mode = #tpu.pipeline_mode<synchronous>, transform_indices = @transform_5, window_bounds = array<i64: 512, 384>}, {pipeline_mode = #tpu.pipeline_mode<synchronous>, transform_indices = @transform_6, window_bounds = array<i64: 1, 384>}, {pipeline_mode = #tpu.pipeline_mode<synchronous>, transform_indices = @transform_7, window_bounds = array<i64: 384, 384>}, {pipeline_mode = #tpu.pipeline_mode<synchronous>, transform_indices = @transform_8, window_bounds = array<i64: 1, 384>}, {pipeline_mode = #tpu.pipeline_mode<synchronous>, transform_indices = @transform_9, window_bounds = array<i64: 384, 128>}, {pipeline_mode = #tpu.pipeline_mode<synchronous>, transform_indices = @transform_10, window_bounds = array<i64: 1, 128>}, {transform_indices = @transform_11, window_bounds = array<i64: 2, 128>}]} {
    %c0 = arith.constant 0 : index
    %c0_0 = arith.constant 0 : index
    %0 = vector.load %arg1[%c0, %c0_0] : memref<2x8xf32, #tpu.memory_space<vmem>>, vector<2x8xf32>
    %1 = arith.truncf %0 : vector<2x8xf32> to vector<2x8xbf16>
    %c0_1 = arith.constant 0 : index
    %c0_2 = arith.constant 0 : index
    %2 = vector.load %arg2[%c0_1, %c0_2] : memref<8x512xbf16, #tpu.memory_space<vmem>>, vector<8x512xbf16>
    %cst = arith.constant dense<0.000000e+00> : vector<2x512xf32>
    %3 = tpu.matmul %1, %2, %cst {dimension_numbers = #tpu.dot_dimension_numbers<[1], [0], [0], [1], [0, 0, 1, 1], [], []>} : vector<2x8xbf16>, vector<8x512xbf16>, vector<2x512xf32> -> vector<2x512xf32>
    %c0_3 = arith.constant 0 : index
    %c0_4 = arith.constant 0 : index
    %4 = vector.load %arg3[%c0_3, %c0_4] : memref<1x512xf32, #tpu.memory_space<vmem>>, vector<1x512xf32>
    %5 = vector.broadcast %4 : vector<1x512xf32> to vector<2x512xf32>
    %6 = arith.addf %3, %5 : vector<2x512xf32>
    %cst_5 = arith.constant 0.000000e+00 : f32
    %7 = vector.broadcast %cst_5 : f32 to vector<2x512xf32>
    %8 = arith.maximumf %6, %7 : vector<2x512xf32>
    %9 = arith.truncf %8 : vector<2x512xf32> to vector<2x512xbf16>
    %c0_6 = arith.constant 0 : index
    %c0_7 = arith.constant 0 : index
    %10 = vector.load %arg4[%c0_6, %c0_7] : memref<512x512xbf16, #tpu.memory_space<vmem>>, vector<512x512xbf16>
    %cst_8 = arith.constant dense<0.000000e+00> : vector<2x512xf32>
    %11 = tpu.matmul %9, %10, %cst_8 {dimension_numbers = #tpu.dot_dimension_numbers<[1], [0], [0], [1], [0, 0, 1, 1], [], []>} : vector<2x512xbf16>, vector<512x512xbf16>, vector<2x512xf32> -> vector<2x512xf32>
    %c0_9 = arith.constant 0 : index
    %c0_10 = arith.constant 0 : index
    %12 = vector.load %arg5[%c0_9, %c0_10] : memref<1x512xf32, #tpu.memory_space<vmem>>, vector<1x512xf32>
    %13 = vector.broadcast %12 : vector<1x512xf32> to vector<2x512xf32>
    %14 = arith.addf %11, %13 : vector<2x512xf32>
    %cst_11 = arith.constant 0.000000e+00 : f32
    %15 = vector.broadcast %cst_11 : f32 to vector<2x512xf32>
    %16 = arith.maximumf %14, %15 : vector<2x512xf32>
    %17 = arith.truncf %16 : vector<2x512xf32> to vector<2x512xbf16>
    %c0_12 = arith.constant 0 : index
    %c0_13 = arith.constant 0 : index
    %18 = vector.load %arg6[%c0_12, %c0_13] : memref<512x384xbf16, #tpu.memory_space<vmem>>, vector<512x384xbf16>
    %cst_14 = arith.constant dense<0.000000e+00> : vector<2x384xf32>
    %19 = tpu.matmul %17, %18, %cst_14 {dimension_numbers = #tpu.dot_dimension_numbers<[1], [0], [0], [1], [0, 0, 1, 1], [], []>} : vector<2x512xbf16>, vector<512x384xbf16>, vector<2x384xf32> -> vector<2x384xf32>
    %c0_15 = arith.constant 0 : index
    %c0_16 = arith.constant 0 : index
    %20 = vector.load %arg7[%c0_15, %c0_16] : memref<1x384xf32, #tpu.memory_space<vmem>>, vector<1x384xf32>
    %21 = vector.broadcast %20 : vector<1x384xf32> to vector<2x384xf32>
    %22 = arith.addf %19, %21 : vector<2x384xf32>
    %cst_17 = arith.constant 0.000000e+00 : f32
    %23 = vector.broadcast %cst_17 : f32 to vector<2x384xf32>
    %24 = arith.maximumf %22, %23 : vector<2x384xf32>
    %25 = arith.truncf %24 : vector<2x384xf32> to vector<2x384xbf16>
    %c0_18 = arith.constant 0 : index
    %c0_19 = arith.constant 0 : index
    %26 = vector.load %arg8[%c0_18, %c0_19] : memref<384x384xbf16, #tpu.memory_space<vmem>>, vector<384x384xbf16>
    %cst_20 = arith.constant dense<0.000000e+00> : vector<2x384xf32>
    %27 = tpu.matmul %25, %26, %cst_20 {dimension_numbers = #tpu.dot_dimension_numbers<[1], [0], [0], [1], [0, 0, 1, 1], [], []>} : vector<2x384xbf16>, vector<384x384xbf16>, vector<2x384xf32> -> vector<2x384xf32>
    %c0_21 = arith.constant 0 : index
    %c0_22 = arith.constant 0 : index
    %28 = vector.load %arg9[%c0_21, %c0_22] : memref<1x384xf32, #tpu.memory_space<vmem>>, vector<1x384xf32>
    %29 = vector.broadcast %28 : vector<1x384xf32> to vector<2x384xf32>
    %30 = arith.addf %27, %29 : vector<2x384xf32>
    %cst_23 = arith.constant 0.000000e+00 : f32
    %31 = vector.broadcast %cst_23 : f32 to vector<2x384xf32>
    %32 = arith.maximumf %30, %31 : vector<2x384xf32>
    %33 = arith.truncf %32 : vector<2x384xf32> to vector<2x384xbf16>
    %c0_24 = arith.constant 0 : index
    %c0_25 = arith.constant 0 : index
    %34 = vector.load %arg10[%c0_24, %c0_25] : memref<384x128xbf16, #tpu.memory_space<vmem>>, vector<384x128xbf16>
    %cst_26 = arith.constant dense<0.000000e+00> : vector<2x128xf32>
    %35 = tpu.matmul %33, %34, %cst_26 {dimension_numbers = #tpu.dot_dimension_numbers<[1], [0], [0], [1], [0, 0, 1, 1], [], []>} : vector<2x384xbf16>, vector<384x128xbf16>, vector<2x128xf32> -> vector<2x128xf32>
    %c0_27 = arith.constant 0 : index
    %c0_28 = arith.constant 0 : index
    %36 = vector.load %arg11[%c0_27, %c0_28] : memref<1x128xf32, #tpu.memory_space<vmem>>, vector<1x128xf32>
    %37 = vector.broadcast %36 : vector<1x128xf32> to vector<2x128xf32>
    %38 = arith.addf %35, %37 : vector<2x128xf32>
    %39 = math.tanh %38 : vector<2x128xf32>
    %cst_29 = arith.constant 2.000000e+00 : f32
    %40 = vector.broadcast %cst_29 : f32 to vector<2x128xf32>
    %41 = arith.mulf %40, %39 : vector<2x128xf32>
    %c0_30 = arith.constant 0 : index
    %c0_31 = arith.constant 0 : index
    %42 = vector.load %arg12[%c0_30, %c0_31] : memref<2x128xf32, #tpu.memory_space<vmem>>, vector<2x128xf32>
    tpu.vector_store %arg12[%c0_30, %c0_31], %41 {strides = array<i32>} : memref<2x128xf32, #tpu.memory_space<vmem>>, vector<2x128xf32>,
    return
  }
  func.func @transform_0(%arg0: i32) -> (i32, i32) {
    %c0_i32 = arith.constant 0 : i32
    %c0_i32_0 = arith.constant 0 : i32
    return %arg0, %c0_i32 : i32, i32
  }
  func.func @transform_1(%arg0: i32) -> (i32, i32) {
    %c0_i32 = arith.constant 0 : i32
    %c0_i32_0 = arith.constant 0 : i32
    %c0_i32_1 = arith.constant 0 : i32
    return %c0_i32, %c0_i32_0 : i32, i32
  }
  func.func @transform_2(%arg0: i32) -> (i32, i32) {
    %c0_i32 = arith.constant 0 : i32
    %c0_i32_0 = arith.constant 0 : i32
    %c0_i32_1 = arith.constant 0 : i32
    return %c0_i32, %c0_i32_0 : i32, i32
  }
  func.func @transform_3(%arg0: i32) -> (i32, i32) {
    %c0_i32 = arith.constant 0 : i32
    %c0_i32_0 = arith.constant 0 : i32
    %c0_i32_1 = arith.constant 0 : i32
    return %c0_i32, %c0_i32_0 : i32, i32
  }
  func.func @transform_4(%arg0: i32) -> (i32, i32) {
    %c0_i32 = arith.constant 0 : i32
    %c0_i32_0 = arith.constant 0 : i32
    %c0_i32_1 = arith.constant 0 : i32
    return %c0_i32, %c0_i32_0 : i32, i32
  }
  func.func @transform_5(%arg0: i32) -> (i32, i32) {
    %c0_i32 = arith.constant 0 : i32
    %c0_i32_0 = arith.constant 0 : i32
    %c0_i32_1 = arith.constant 0 : i32
    return %c0_i32, %c0_i32_0 : i32, i32
  }
  func.func @transform_6(%arg0: i32) -> (i32, i32) {
    %c0_i32 = arith.constant 0 : i32
    %c0_i32_0 = arith.constant 0 : i32
    %c0_i32_1 = arith.constant 0 : i32
    return %c0_i32, %c0_i32_0 : i32, i32
  }
  func.func @transform_7(%arg0: i32) -> (i32, i32) {
    %c0_i32 = arith.constant 0 : i32
    %c0_i32_0 = arith.constant 0 : i32
    %c0_i32_1 = arith.constant 0 : i32
    return %c0_i32, %c0_i32_0 : i32, i32
  }
  func.func @transform_8(%arg0: i32) -> (i32, i32) {
    %c0_i32 = arith.constant 0 : i32
    %c0_i32_0 = arith.constant 0 : i32
    %c0_i32_1 = arith.constant 0 : i32
    return %c0_i32, %c0_i32_0 : i32, i32
  }
  func.func @transform_9(%arg0: i32) -> (i32, i32) {
    %c0_i32 = arith.constant 0 : i32
    %c0_i32_0 = arith.constant 0 : i32
    %c0_i32_1 = arith.constant 0 : i32
    return %c0_i32, %c0_i32_0 : i32, i32
  }
  func.func @transform_10(%arg0: i32) -> (i32, i32) {
    %c0_i32 = arith.constant 0 : i32
    %c0_i32_0 = arith.constant 0 : i32
    %c0_i32_1 = arith.constant 0 : i32
    return %c0_i32, %c0_i32_0 : i32, i32
  }
  func.func @transform_11(%arg0: i32) -> (i32, i32) {
    %c0_i32 = arith.constant 0 : i32
    %c0_i32_0 = arith.constant 0 : i32
    return %arg0, %c0_i32 : i32, i32
  }
}

</mosaic_0001>

<llo_original>
// kernel: tpu_custom_call.1
$region0: #{tpu_custom_call.1}
  #allocation0 [shape = 'u32[]', space=smem, size = 0x4, offset = 0x4, fixed_abs, tag = 'smem constant byte address 0x4 - core index']
  #allocation1 [shape = 'u32[72,128]{1,0:T(1,128)}', space=vmem, size = 0x9000, scoped, tag = 'internal scratch']
  %s0 = inlined_call_operand.hbm [shape: f32[2,8], index: 0, kind: input, shape index: {}]
  %s1 = inlined_call_operand.hbm [shape: bf16[8,512], index: 1, kind: input, shape index: {}]
  %s2 = inlined_call_operand.hbm [shape: f32[1,512], index: 2, kind: input, shape index: {}]
  %s3 = inlined_call_operand.hbm [shape: bf16[512,512], index: 3, kind: input, shape index: {}]
  %s4 = inlined_call_operand.hbm [shape: f32[1,512], index: 4, kind: input, shape index: {}]
  %s5 = inlined_call_operand.hbm [shape: bf16[512,384], index: 5, kind: input, shape index: {}]
  %s6 = inlined_call_operand.vmem [shape: f32[1,384], index: 6, kind: input, shape index: {}]
  %s7 = inlined_call_operand.hbm [shape: bf16[384,384], index: 7, kind: input, shape index: {}]
  %s8 = inlined_call_operand.vmem [shape: f32[1,384], index: 8, kind: input, shape index: {}]
  %s9 = inlined_call_operand.hbm [shape: bf16[384,128], index: 9, kind: input, shape index: {}]
  %s10 = inlined_call_operand.vmem [shape: f32[1,128], index: 10, kind: input, shape index: {}]
  %s11 = inlined_call_operand.hbm [shape: f32[2,128], index: 11, kind: output, shape index: {}]
  %s12 = sld [smem:[#allocation0]]
  $region86: #{tpu_custom_call.1} parent=0
    _
  %s14 = ssub.s32 1, %s12
  %s15 = scalar_select 0, %s14, %s12
  $region1: #{tpu_custom_call.1} parent=0
    #allocation2 [shape = 'u8[1024]{0}', space=vmem, size = 0x400, scoped, tag = 'input window, operand 0, single buffered']
    #allocation3 [shape = 's32[1]{0}', space=sflag, size = 0x4, scoped, tag = 'scoped memory for tpu_custom_call.1']
    #allocation4 [shape = 's32[1]{0}', space=sflag, size = 0x4, scoped, tag = 'scoped memory for tpu_custom_call.1']
    #allocation5 [shape = 'u8[8192]{0}', space=vmem, size = 0x2000, scoped, tag = 'input window, operand 1, single buffered']
    #allocation6 [shape = 's32[1]{0}', space=sflag, size = 0x4, scoped, tag = 'scoped memory for tpu_custom_call.1']
    #allocation7 [shape = 'u8[2048]{0}', space=vmem, size = 0x800, scoped, tag = 'input window, operand 2, single buffered']
    #allocation8 [shape = 'u8[524288]{0}', space=vmem, size = 0x80000, scoped, tag = 'input window, operand 3, single buffered']
    #allocation9 [shape = 's32[1]{0}', space=sflag, size = 0x4, scoped, tag = 'scoped memory for tpu_custom_call.1']
    #allocation10 [shape = 'u8[2048]{0}', space=vmem, size = 0x800, scoped, tag = 'input window, operand 4, single buffered']
    #allocation11 [shape = 'u8[393216]{0}', space=vmem, size = 0x60000, scoped, tag = 'input window, operand 5, single buffered']
    #allocation12 [shape = 's32[1]{0}', space=sflag, size = 0x4, scoped, tag = 'scoped memory for tpu_custom_call.1']
    #allocation13 [shape = 'u8[294912]{0}', space=vmem, size = 0x48000, scoped, tag = 'input window, operand 7, single buffered']
    #allocation14 [shape = 'u8[98304]{0}', space=vmem, size = 0x18000, scoped, tag = 'input window, operand 9, single buffered']
    #allocation15 [shape = 's32[1]{0}', space=sflag, size = 0x4, scoped, tag = 'scoped memory for tpu_custom_call.1']
    #allocation16 [shape = 'u8[1024]{0}', space=vmem, size = 0x400, scoped, tag = 'output window, operand 0, single buffered']
    %16 = vsyncpa [#allocation3], 0
    %17 = vsyncpa [#allocation6], 0
    %18 = vsyncpa [#allocation9], 0
    %19 = vsyncpa [#allocation12], 0
    %20 = vsyncpa [#allocation15], 0
    %21 = vsyncpa [#allocation4], 0
    // Predicated region
    $region2: #{tpu_custom_call.1} parent=1 // pred_check
      _
    $region3: #{tpu_custom_call.1} parent=1 // pred_check_branch
      %23 = sbr.rel (0) target = $region5
    $region4: #{tpu_custom_call.1} parent=1 // pred_region
      %25 = vsyncadd [#allocation3], 0
      %s27 = sshll.u32 %s0, 4
      %s28 = int_to_ptr.hbm [resolvable:$true] %s27
      %s29 = sshll.u32 [#allocation2], 4
      %s30 = int_to_ptr.vmem [resolvable:$true] %s29
      %32 = dma.hbm_to_vmem [thread:$0]  %s28, 32, %s30, [#allocation3]
    $region5: #{tpu_custom_call.1} parent=1 // pred_fallthru
      _
    // Predicated region
    $region6: #{tpu_custom_call.1} parent=1 // pred_check
      _
    $region7: #{tpu_custom_call.1} parent=1 // pred_check_branch
      %34 = sbr.rel (0) target = $region9
    $region8: #{tpu_custom_call.1} parent=1 // pred_region
      %36 = vsyncadd [#allocation6], 0
      %s38 = sshll.u32 %s1, 4
      %s39 = int_to_ptr.hbm [resolvable:$true] %s38
      %s40 = sshll.u32 [#allocation5], 4
      %s41 = int_to_ptr.vmem [resolvable:$true] %s40
      %43 = dma.hbm_to_vmem [thread:$0]  %s39, 256, %s41, [#allocation6]
    $region9: #{tpu_custom_call.1} parent=1 // pred_fallthru
      _
    // Predicated region
    $region10: #{tpu_custom_call.1} parent=1 // pred_check
      _
    $region11: #{tpu_custom_call.1} parent=1 // pred_check_branch
      %45 = sbr.rel (0) target = $region13
    $region12: #{tpu_custom_call.1} parent=1 // pred_region
      %47 = vsyncadd [#allocation6], 0
      %s49 = sshll.u32 %s2, 4
      %s50 = int_to_ptr.hbm [resolvable:$true] %s49
      %s51 = sshll.u32 [#allocation7], 4
      %s52 = int_to_ptr.vmem [resolvable:$true] %s51
      %54 = dma.hbm_to_vmem [thread:$0]  %s50, 64, %s52, [#allocation6]
    $region13: #{tpu_custom_call.1} parent=1 // pred_fallthru
      _
    // Predicated region
    $region14: #{tpu_custom_call.1} parent=1 // pred_check
      _
    $region15: #{tpu_custom_call.1} parent=1 // pred_check_branch
      %56 = sbr.rel (0) target = $region17
    $region16: #{tpu_custom_call.1} parent=1 // pred_region
      %58 = vsyncadd [#allocation9], 0
      %s59 = sshll.u32 %s3, 4
      %s60 = int_to_ptr.hbm [resolvable:$true] %s59
      %s61 = sshll.u32 [#allocation8], 4
      %s62 = int_to_ptr.vmem [resolvable:$true] %s61
      %67 = dma.hbm_to_vmem [thread:$0]  %s60, 16384, %s62, [#allocation9], 256, 256, 16
    $region17: #{tpu_custom_call.1} parent=1 // pred_fallthru
      _
    // Predicated region
    $region18: #{tpu_custom_call.1} parent=1 // pred_check
      _
    $region19: #{tpu_custom_call.1} parent=1 // pred_check_branch
      %69 = sbr.rel (0) target = $region21
    $region20: #{tpu_custom_call.1} parent=1 // pred_region
      %71 = vsyncadd [#allocation9], 0
      %s73 = sshll.u32 %s4, 4
      %s74 = int_to_ptr.hbm [resolvable:$true] %s73
      %s75 = sshll.u32 [#allocation10], 4
      %s76 = int_to_ptr.vmem [resolvable:$true] %s75
      %78 = dma.hbm_to_vmem [thread:$0]  %s74, 64, %s76, [#allocation9]
    $region21: #{tpu_custom_call.1} parent=1 // pred_fallthru
      _
    // Predicated region
    $region22: #{tpu_custom_call.1} parent=1 // pred_check
      _
    $region23: #{tpu_custom_call.1} parent=1 // pred_check_branch
      %80 = sbr.rel (0) target = $region25
    $region24: #{tpu_custom_call.1} parent=1 // pred_region
      %82 = vsyncadd [#allocation12], 0
      %s83 = sshll.u32 %s5, 4
      %s84 = int_to_ptr.hbm [resolvable:$true] %s83
      %s85 = sshll.u32 [#allocation11], 4
      %s86 = int_to_ptr.vmem [resolvable:$true] %s85
      %91 = dma.hbm_to_vmem [thread:$0]  %s84, 12288, %s86, [#allocation12], 192, 192, 12
    $region25: #{tpu_custom_call.1} parent=1 // pred_fallthru
      _
    // Predicated region
    $region26: #{tpu_custom_call.1} parent=1 // pred_check
      _
    $region27: #{tpu_custom_call.1} parent=1 // pred_check_branch
      %93 = sbr.rel (0) target = $region29
    $region28: #{tpu_custom_call.1} parent=1 // pred_region
      _
    $region29: #{tpu_custom_call.1} parent=1 // pred_fallthru
      _
    // Predicated region
    $region30: #{tpu_custom_call.1} parent=1 // pred_check
      _
    $region31: #{tpu_custom_call.1} parent=1 // pred_check_branch
      %95 = sbr.rel (0) target = $region33
    $region32: #{tpu_custom_call.1} parent=1 // pred_region
      %97 = vsyncadd [#allocation12], 0
      %s98 = sshll.u32 %s7, 4
      %s99 = int_to_ptr.hbm [resolvable:$true] %s98
      %s100 = sshll.u32 [#allocation13], 4
      %s101 = int_to_ptr.vmem [resolvable:$true] %s100
      %106 = dma.hbm_to_vmem [thread:$0]  %s99, 9216, %s101, [#allocation12], 192, 192, 12
    $region33: #{tpu_custom_call.1} parent=1 // pred_fallthru
      _
    // Predicated region
    $region34: #{tpu_custom_call.1} parent=1 // pred_check
      _
    $region35: #{tpu_custom_call.1} parent=1 // pred_check_branch
      %108 = sbr.rel (0) target = $region37
    $region36: #{tpu_custom_call.1} parent=1 // pred_region
      _
    $region37: #{tpu_custom_call.1} parent=1 // pred_fallthru
      _
    // Predicated region
    $region38: #{tpu_custom_call.1} parent=1 // pred_check
      _
    $region39: #{tpu_custom_call.1} parent=1 // pred_check_branch
      %110 = sbr.rel (0) target = $region41
    $region40: #{tpu_custom_call.1} parent=1 // pred_region
      %112 = vsyncadd [#allocation15], 0
      %s113 = sshll.u32 %s9, 4
      %s114 = int_to_ptr.hbm [resolvable:$true] %s113
      %s115 = sshll.u32 [#allocation14], 4
      %s116 = int_to_ptr.vmem [resolvable:$true] %s115
      %121 = dma.hbm_to_vmem [thread:$0]  %s114, 3072, %s116, [#allocation15], 64, 64, 4
    $region41: #{tpu_custom_call.1} parent=1 // pred_fallthru
      _
    // Predicated region
    $region42: #{tpu_custom_call.1} parent=1 // pred_check
      _
    $region43: #{tpu_custom_call.1} parent=1 // pred_check_branch
      %123 = sbr.rel (0) target = $region45
    $region44: #{tpu_custom_call.1} parent=1 // pred_region
      _
    $region45: #{tpu_custom_call.1} parent=1 // pred_fallthru
      _
    // Predicated region
    $region46: #{tpu_custom_call.1} parent=1 // pred_check
      _
    $region47: #{tpu_custom_call.1} parent=1 // pred_check_branch
      %125 = sbr.rel (0) target = $region49
    $region48: #{tpu_custom_call.1} parent=1 // pred_region
      %127 = dma.done [#allocation3], 32
    $region49: #{tpu_custom_call.1} parent=1 // pred_fallthru
      _
    // Predicated region
    $region50: #{tpu_custom_call.1} parent=1 // pred_check
      _
    $region51: #{tpu_custom_call.1} parent=1 // pred_check_branch
      %129 = sbr.rel (0) target = $region53
    $region52: #{tpu_custom_call.1} parent=1 // pred_region
      %131 = dma.done [#allocation6], 256
    $region53: #{tpu_custom_call.1} parent=1 // pred_fallthru
      _
    // Predicated region
    $region54: #{tpu_custom_call.1} parent=1 // pred_check
      _
    $region55: #{tpu_custom_call.1} parent=1 // pred_check_branch
      %133 = sbr.rel (0) target = $region57
    $region56: #{tpu_custom_call.1} parent=1 // pred_region
      %135 = dma.done [#allocation6], 64
    $region57: #{tpu_custom_call.1} parent=1 // pred_fallthru
      _
    // Predicated region
    $region58: #{tpu_custom_call.1} parent=1 // pred_check
      _
    $region59: #{tpu_custom_call.1} parent=1 // pred_check_branch
      %137 = sbr.rel (0) target = $region61
    $region60: #{tpu_custom_call.1} parent=1 // pred_region
      %139 = dma.done [#allocation9], 16384
    $region61: #{tpu_custom_call.1} parent=1 // pred_fallthru
      _
    // Predicated region
    $region62: #{tpu_custom_call.1} parent=1 // pred_check
      _
    $region63: #{tpu_custom_call.1} parent=1 // pred_check_branch
      %141 = sbr.rel (0) target = $region65
    $region64: #{tpu_custom_call.1} parent=1 // pred_region
      %143 = dma.done [#allocation9], 64
    $region65: #{tpu_custom_call.1} parent=1 // pred_fallthru
      _
    // Predicated region
    $region66: #{tpu_custom_call.1} parent=1 // pred_check
      _
    $region67: #{tpu_custom_call.1} parent=1 // pred_check_branch
      %145 = sbr.rel (0) target = $region69
    $region68: #{tpu_custom_call.1} parent=1 // pred_region
      %147 = dma.done [#allocation12], 12288
    $region69: #{tpu_custom_call.1} parent=1 // pred_fallthru
      _
    // Predicated region
    $region70: #{tpu_custom_call.1} parent=1 // pred_check
      _
    $region71: #{tpu_custom_call.1} parent=1 // pred_check_branch
      %149 = sbr.rel (0) target = $region73
    $region72: #{tpu_custom_call.1} parent=1 // pred_region
      %151 = dma.done [#allocation12], 9216
    $region73: #{tpu_custom_call.1} parent=1 // pred_fallthru
      _
    // Predicated region
    $region74: #{tpu_custom_call.1} parent=1 // pred_check
      _
    $region75: #{tpu_custom_call.1} parent=1 // pred_check_branch
      %153 = sbr.rel (0) target = $region77
    $region76: #{tpu_custom_call.1} parent=1 // pred_region
      %155 = dma.done [#allocation15], 3072
    $region77: #{tpu_custom_call.1} parent=1 // pred_fallthru
      _
    %v157 = vld [vmem:[#allocation2] sm:$0x3]
    %v158 = vpack.c.bf16 %v157, %v157
    %v159 = vld [vmem:[#allocation5] sm:$0xff]
    %v160 = vld [vmem:[#allocation5 + $0x8] sm:$0xff]
    %v161 = vld [vmem:[#allocation7] sm:$0xf]
    %v163 = vperm.slane %v161, 0
    %v164 = vperm.slane %v161, 1
    %v165 = vperm.slane %v161, 2
    %v166 = vperm.slane %v161, 3
    %v173 = vunpack.c.l.b16 %v159
    %v174 = vunpack.c.h.b16 %v159
    %v175 = vunpack.c.l.b16 %v160
    %v176 = vunpack.c.h.b16 %v160
    %v177 = vpack.c.b16 %v173, %v173
    %v178 = vpack.c.b16 %v174, %v174
    %v179 = vpack.c.b16 %v175, %v175
    %v180 = vpack.c.b16 %v176, %v176
    %vm181 = vcmask 64512
    %v183 = vsel %vm181, %v158, 0
    %vm185 = vcmask 1043456
    %v187 = vsel %vm185, %v177, 0
    %v190 = vsel %vm185, %v178, 0
    %v193 = vsel %vm185, %v179, 0
    %v196 = vsel %vm185, %v180, 0
    %198 = vmatpush.bf16.msra.mxu0 0
    %199 = vmatpush.bf16.msra.mxu0 0
    %200 = vmatpush.bf16.msra.mxu0 0
    %201 = vmatpush.bf16.msra.mxu0 0
    %202 = vmatpush.bf16.msra.mxu0 0
    %203 = vmatpush.bf16.msra.mxu0 0
    %204 = vmatpush.bf16.msra.mxu0 0
    %205 = vmatpush.bf16.msra.mxu0 %v187
    %206 = vmatmul.bf16.gmra.mxu0 %v183
    %v207 = vpop.f32.mrf.mxu0
    %v208 = vadd.f32 %v163, %v207
    %v209 = vpop.f32.mrf.mxu0
    %210 = vdwg.mxu0
    %211 = vmatpush.bf16.msra.mxu0 0
    %212 = vmatpush.bf16.msra.mxu0 0
    %213 = vmatpush.bf16.msra.mxu0 0
    %214 = vmatpush.bf16.msra.mxu0 0
    %215 = vmatpush.bf16.msra.mxu0 0
    %216 = vmatpush.bf16.msra.mxu0 0
    %217 = vmatpush.bf16.msra.mxu0 0
    %218 = vmatpush.bf16.msra.mxu0 %v190
    %219 = vmatmul.bf16.gmra.mxu0 %v183
    %v220 = vpop.f32.mrf.mxu0
    %v221 = vadd.f32 %v164, %v220
    %v222 = vpop.f32.mrf.mxu0
    %223 = vdwg.mxu0
    %224 = vmatpush.bf16.msra.mxu0 0
    %225 = vmatpush.bf16.msra.mxu0 0
    %226 = vmatpush.bf16.msra.mxu0 0
    %227 = vmatpush.bf16.msra.mxu0 0
    %228 = vmatpush.bf16.msra.mxu0 0
    %229 = vmatpush.bf16.msra.mxu0 0
    %230 = vmatpush.bf16.msra.mxu0 0
    %231 = vmatpush.bf16.msra.mxu0 %v193
    %232 = vmatmul.bf16.gmra.mxu0 %v183
    %v233 = vpop.f32.mrf.mxu0
    %v234 = vadd.f32 %v165, %v233
    %v235 = vpop.f32.mrf.mxu0
    %236 = vdwg.mxu0
    %237 = vmatpush.bf16.msra.mxu0 0
    %238 = vmatpush.bf16.msra.mxu0 0
    %239 = vmatpush.bf16.msra.mxu0 0
    %240 = vmatpush.bf16.msra.mxu0 0
    %241 = vmatpush.bf16.msra.mxu0 0
    %242 = vmatpush.bf16.msra.mxu0 0
    %243 = vmatpush.bf16.msra.mxu0 0
    %244 = vmatpush.bf16.msra.mxu0 %v196
    %245 = vmatmul.bf16.gmra.mxu0 %v183
    %v246 = vpop.f32.mrf.mxu0
    %v247 = vadd.f32 %v166, %v246
    %v248 = vpop.f32.mrf.mxu0
    %249 = vdwg.mxu0
    %v250 = vmax.f32 %v208, 0.0
    %v251 = vmax.f32 %v221, 0.0
    %v252 = vmax.f32 %v234, 0.0
    %v253 = vmax.f32 %v247, 0.0
    %v254 = vpack.c.bf16 %v250, %v250
    %v255 = vpack.c.bf16 %v251, %v251
    %v256 = vpack.c.bf16 %v252, %v252
    %v257 = vpack.c.bf16 %v253, %v253
    %v258 = vld [vmem:[#allocation8] sm:$0xff]
    %v259 = vld [vmem:[#allocation8 + $0x8] sm:$0xff]
    %v260 = vld [vmem:[#allocation8 + $0x10] sm:$0xff]
    %v261 = vld [vmem:[#allocation8 + $0x18] sm:$0xff]
    %v262 = vld [vmem:[#allocation8 + $0x20] sm:$0xff]
    %v263 = vld [vmem:[#allocation8 + $0x28] sm:$0xff]
    %v264 = vld [vmem:[#allocation8 + $0x30] sm:$0xff]
    %v265 = vld [vmem:[#allocation8 + $0x38] sm:$0xff]
    %v266 = vld [vmem:[#allocation8 + $0x40] sm:$0xff]
    %v267 = vld [vmem:[#allocation8 + $0x48] sm:$0xff]
    %v268 = vld [vmem:[#allocation8 + $0x50] sm:$0xff]
    %v269 = vld [vmem:[#allocation8 + $0x58] sm:$0xff]
    %v270 = vld [vmem:[#allocation8 + $0x60] sm:$0xff]
    %v271 = vld [vmem:[#allocation8 + $0x68] sm:$0xff]
    %v272 = vld [vmem:[#allocation8 + $0x70] sm:$0xff]
    %v273 = vld [vmem:[#allocation8 + $0x78] sm:$0xff]
    %v274 = vld [vmem:[#allocation8 + $0x80] sm:$0xff]
    %v275 = vld [vmem:[#allocation8 + $0x88] sm:$0xff]
    %v276 = vld [vmem:[#allocation8 + $0x90] sm:$0xff]
    %v277 = vld [vmem:[#allocation8 + $0x98] sm:$0xff]
    %v278 = vld [vmem:[#allocation8 + $0xa0] sm:$0xff]
    %v279 = vld [vmem:[#allocation8 + $0xa8] sm:$0xff]
    %v280 = vld [vmem:[#allocation8 + $0xb0] sm:$0xff]
    %v281 = vld [vmem:[#allocation8 + $0xb8] sm:$0xff]
    %v282 = vld [vmem:[#allocation8 + $0xc0] sm:$0xff]
    %v283 = vld [vmem:[#allocation8 + $0xc8] sm:$0xff]
    %v284 = vld [vmem:[#allocation8 + $0xd0] sm:$0xff]
    %v285 = vld [vmem:[#allocation8 + $0xd8] sm:$0xff]
    %v286 = vld [vmem:[#allocation8 + $0xe0] sm:$0xff]
    %v287 = vld [vmem:[#allocation8 + $0xe8] sm:$0xff]
    %v288 = vld [vmem:[#allocation8 + $0xf0] sm:$0xff]
    %v289 = vld [vmem:[#allocation8 + $0xf8] sm:$0xff]
    %v290 = vld [vmem:[#allocation8 + $0x100] sm:$0xff]
    %v291 = vld [vmem:[#allocation8 + $0x108] sm:$0xff]
    %v292 = vld [vmem:[#allocation8 + $0x110] sm:$0xff]
    %v293 = vld [vmem:[#allocation8 + $0x118] sm:$0xff]
    %v294 = vld [vmem:[#allocation8 + $0x120] sm:$0xff]
    %v295 = vld [vmem:[#allocation8 + $0x128] sm:$0xff]
    %v296 = vld [vmem:[#allocation8 + $0x130] sm:$0xff]
    %v297 = vld [vmem:[#allocation8 + $0x138] sm:$0xff]
    %v298 = vld [vmem:[#allocation8 + $0x140] sm:$0xff]
    %v299 = vld [vmem:[#allocation8 + $0x148] sm:$0xff]
    %v300 = vld [vmem:[#allocation8 + $0x150] sm:$0xff]
    %v301 = vld [vmem:[#allocation8 + $0x158] sm:$0xff]
    %v302 = vld [vmem:[#allocation8 + $0x160] sm:$0xff]
    %v303 = vld [vmem:[#allocation8 + $0x168] sm:$0xff]
    %v304 = vld [vmem:[#allocation8 + $0x170] sm:$0xff]
    %v305 = vld [vmem:[#allocation8 + $0x178] sm:$0xff]
    %v306 = vld [vmem:[#allocation8 + $0x180] sm:$0xff]
    %v307 = vld [vmem:[#allocation8 + $0x188] sm:$0xff]
    %v308 = vld [vmem:[#allocation8 + $0x190] sm:$0xff]
    %v309 = vld [vmem:[#allocation8 + $0x198] sm:$0xff]
    %v310 = vld [vmem:[#allocation8 + $0x1a0] sm:$0xff]
    %v311 = vld [vmem:[#allocation8 + $0x1a8] sm:$0xff]
    %v312 = vld [vmem:[#allocation8 + $0x1b0] sm:$0xff]
    %v313 = vld [vmem:[#allocation8 + $0x1b8] sm:$0xff]
    %v314 = vld [vmem:[#allocation8 + $0x1c0] sm:$0xff]
    %v315 = vld [vmem:[#allocation8 + $0x1c8] sm:$0xff]
    %v316 = vld [vmem:[#allocation8 + $0x1d0] sm:$0xff]
    %v317 = vld [vmem:[#allocation8 + $0x1d8] sm:$0xff]
    %v318 = vld [vmem:[#allocation8 + $0x1e0] sm:$0xff]
    %v319 = vld [vmem:[#allocation8 + $0x1e8] sm:$0xff]
    %v320 = vld [vmem:[#allocation8 + $0x1f0] sm:$0xff]
    %v321 = vld [vmem:[#allocation8 + $0x1f8] sm:$0xff]
    %v322 = vld [vmem:[#allocation8 + $0x200] sm:$0xff]
    %v323 = vld [vmem:[#allocation8 + $0x208] sm:$0xff]
    %v324 = vld [vmem:[#allocation8 + $0x210] sm:$0xff]
    %v325 = vld [vmem:[#allocation8 + $0x218] sm:$0xff]
    %v326 = vld [vmem:[#allocation8 + $0x220] sm:$0xff]
    %v327 = vld [vmem:[#allocation8 + $0x228] sm:$0xff]
    %v328 = vld [vmem:[#allocation8 + $0x230] sm:$0xff]
    %v329 = vld [vmem:[#allocation8 + $0x238] sm:$0xff]
    %v330 = vld [vmem:[#allocation8 + $0x240] sm:$0xff]
    %v331 = vld [vmem:[#allocation8 + $0x248] sm:$0xff]
    %v332 = vld [vmem:[#allocation8 + $0x250] sm:$0xff]
    %v333 = vld [vmem:[#allocation8 + $0x258] sm:$0xff]
    %v334 = vld [vmem:[#allocation8 + $0x260] sm:$0xff]
    %v335 = vld [vmem:[#allocation8 + $0x268] sm:$0xff]
    %v336 = vld [vmem:[#allocation8 + $0x270] sm:$0xff]
    %v337 = vld [vmem:[#allocation8 + $0x278] sm:$0xff]
    %v338 = vld [vmem:[#allocation8 + $0x280] sm:$0xff]
    %v339 = vld [vmem:[#allocation8 + $0x288] sm:$0xff]
    %v340 = vld [vmem:[#allocation8 + $0x290] sm:$0xff]
    %v341 = vld [vmem:[#allocation8 + $0x298] sm:$0xff]
    %v342 = vld [vmem:[#allocation8 + $0x2a0] sm:$0xff]
    %v343 = vld [vmem:[#allocation8 + $0x2a8] sm:$0xff]
    %v344 = vld [vmem:[#allocation8 + $0x2b0] sm:$0xff]
    %v345 = vld [vmem:[#allocation8 + $0x2b8] sm:$0xff]
    %v346 = vld [vmem:[#allocation8 + $0x2c0] sm:$0xff]
    %v347 = vld [vmem:[#allocation8 + $0x2c8] sm:$0xff]
    %v348 = vld [vmem:[#allocation8 + $0x2d0] sm:$0xff]
    %v349 = vld [vmem:[#allocation8 + $0x2d8] sm:$0xff]
    %v350 = vld [vmem:[#allocation8 + $0x2e0] sm:$0xff]
    %v351 = vld [vmem:[#allocation8 + $0x2e8] sm:$0xff]
    %v352 = vld [vmem:[#allocation8 + $0x2f0] sm:$0xff]
    %v353 = vld [vmem:[#allocation8 + $0x2f8] sm:$0xff]
    %v354 = vld [vmem:[#allocation8 + $0x300] sm:$0xff]
    %v355 = vld [vmem:[#allocation8 + $0x308] sm:$0xff]
    %v356 = vld [vmem:[#allocation8 + $0x310] sm:$0xff]
    %v357 = vld [vmem:[#allocation8 + $0x318] sm:$0xff]
    %v358 = vld [vmem:[#allocation8 + $0x320] sm:$0xff]
    %v359 = vld [vmem:[#allocation8 + $0x328] sm:$0xff]
    %v360 = vld [vmem:[#allocation8 + $0x330] sm:$0xff]
    %v361 = vld [vmem:[#allocation8 + $0x338] sm:$0xff]
    %v362 = vld [vmem:[#allocation8 + $0x340] sm:$0xff]
    %v363 = vld [vmem:[#allocation8 + $0x348] sm:$0xff]
    %v364 = vld [vmem:[#allocation8 + $0x350] sm:$0xff]
    %v365 = vld [vmem:[#allocation8 + $0x358] sm:$0xff]
    %v366 = vld [vmem:[#allocation8 + $0x360] sm:$0xff]
    %v367 = vld [vmem:[#allocation8 + $0x368] sm:$0xff]
    %v368 = vld [vmem:[#allocation8 + $0x370] sm:$0xff]
    %v369 = vld [vmem:[#allocation8 + $0x378] sm:$0xff]
    %v370 = vld [vmem:[#allocation8 + $0x380] sm:$0xff]
    %v371 = vld [vmem:[#allocation8 + $0x388] sm:$0xff]
    %v372 = vld [vmem:[#allocation8 + $0x390] sm:$0xff]
    %v373 = vld [vmem:[#allocation8 + $0x398] sm:$0xff]
    %v374 = vld [vmem:[#allocation8 + $0x3a0] sm:$0xff]
    %v375 = vld [vmem:[#allocation8 + $0x3a8] sm:$0xff]
    %v376 = vld [vmem:[#allocation8 + $0x3b0] sm:$0xff]
    %v377 = vld [vmem:[#allocation8 + $0x3b8] sm:$0xff]
    %v378 = vld [vmem:[#allocation8 + $0x3c0] sm:$0xff]
    %v379 = vld [vmem:[#allocation8 + $0x3c8] sm:$0xff]
    %v380 = vld [vmem:[#allocation8 + $0x3d0] sm:$0xff]
    %v381 = vld [vmem:[#allocation8 + $0x3d8] sm:$0xff]
    %v382 = vld [vmem:[#allocation8 + $0x3e0] sm:$0xff]
    %v383 = vld [vmem:[#allocation8 + $0x3e8] sm:$0xff]
    %v384 = vld [vmem:[#allocation8 + $0x3f0] sm:$0xff]
    %v385 = vld [vmem:[#allocation8 + $0x3f8] sm:$0xff]
    %v386 = vld [vmem:[#allocation10] sm:$0xf]
    %v388 = vperm.slane %v386, 0
    %v389 = vperm.slane %v386, 1
    %v390 = vperm.slane %v386, 2
    %v391 = vperm.slane %v386, 3
    %v524 = vunpack.c.l.b16 %v258
    %v525 = vunpack.c.h.b16 %v258
    %v526 = vunpack.c.l.b16 %v259
    %v527 = vunpack.c.h.b16 %v259
    %v528 = vunpack.c.l.b16 %v260
    %v529 = vunpack.c.h.b16 %v260
    %v530 = vunpack.c.l.b16 %v261
    %v531 = vunpack.c.h.b16 %v261
    %v532 = vunpack.c.l.b16 %v262
    %v533 = vunpack.c.h.b16 %v262
    %v534 = vunpack.c.l.b16 %v263
    %v535 = vunpack.c.h.b16 %v263
    %v536 = vunpack.c.l.b16 %v264
    %v537 = vunpack.c.h.b16 %v264
    %v538 = vunpack.c.l.b16 %v265
    %v539 = vunpack.c.h.b16 %v265
    %v540 = vunpack.c.l.b16 %v266
    %v541 = vunpack.c.h.b16 %v266
    %v542 = vunpack.c.l.b16 %v267
    %v543 = vunpack.c.h.b16 %v267
    %v544 = vunpack.c.l.b16 %v268
    %v545 = vunpack.c.h.b16 %v268
    %v546 = vunpack.c.l.b16 %v269
    %v547 = vunpack.c.h.b16 %v269
    %v548 = vunpack.c.l.b16 %v270
    %v549 = vunpack.c.h.b16 %v270
    %v550 = vunpack.c.l.b16 %v271
    %v551 = vunpack.c.h.b16 %v271
    %v552 = vunpack.c.l.b16 %v272
    %v553 = vunpack.c.h.b16 %v272
    %v554 = vunpack.c.l.b16 %v273
    %v555 = vunpack.c.h.b16 %v273
    %v556 = vunpack.c.l.b16 %v274
    %v557 = vunpack.c.h.b16 %v274
    %v558 = vunpack.c.l.b16 %v275
    %v559 = vunpack.c.h.b16 %v275
    %v560 = vunpack.c.l.b16 %v276
    %v561 = vunpack.c.h.b16 %v276
    %v562 = vunpack.c.l.b16 %v277
    %v563 = vunpack.c.h.b16 %v277
    %v564 = vunpack.c.l.b16 %v278
    %v565 = vunpack.c.h.b16 %v278
    %v566 = vunpack.c.l.b16 %v279
    %v567 = vunpack.c.h.b16 %v279
    %v568 = vunpack.c.l.b16 %v280
    %v569 = vunpack.c.h.b16 %v280
    %v570 = vunpack.c.l.b16 %v281
    %v571 = vunpack.c.h.b16 %v281
    %v572 = vunpack.c.l.b16 %v282
    %v573 = vunpack.c.h.b16 %v282
    %v574 = vunpack.c.l.b16 %v283
    %v575 = vunpack.c.h.b16 %v283
    %v576 = vunpack.c.l.b16 %v284
    %v577 = vunpack.c.h.b16 %v284
    %v578 = vunpack.c.l.b16 %v285
    %v579 = vunpack.c.h.b16 %v285
    %v580 = vunpack.c.l.b16 %v286
    %v581 = vunpack.c.h.b16 %v286
    %v582 = vunpack.c.l.b16 %v287
    %v583 = vunpack.c.h.b16 %v287
    %v584 = vunpack.c.l.b16 %v288
    %v585 = vunpack.c.h.b16 %v288
    %v586 = vunpack.c.l.b16 %v289
    %v587 = vunpack.c.h.b16 %v289
    %v588 = vunpack.c.l.b16 %v290
    %v589 = vunpack.c.h.b16 %v290
    %v590 = vunpack.c.l.b16 %v291
    %v591 = vunpack.c.h.b16 %v291
    %v592 = vunpack.c.l.b16 %v292
    %v593 = vunpack.c.h.b16 %v292
    %v594 = vunpack.c.l.b16 %v293
    %v595 = vunpack.c.h.b16 %v293
    %v596 = vunpack.c.l.b16 %v294
    %v597 = vunpack.c.h.b16 %v294
    %v598 = vunpack.c.l.b16 %v295
    %v599 = vunpack.c.h.b16 %v295
    %v600 = vunpack.c.l.b16 %v296
    %v601 = vunpack.c.h.b16 %v296
    %v602 = vunpack.c.l.b16 %v297
    %v603 = vunpack.c.h.b16 %v297
    %v604 = vunpack.c.l.b16 %v298
    %v605 = vunpack.c.h.b16 %v298
    %v606 = vunpack.c.l.b16 %v299
    %v607 = vunpack.c.h.b16 %v299
    %v608 = vunpack.c.l.b16 %v300
    %v609 = vunpack.c.h.b16 %v300
    %v610 = vunpack.c.l.b16 %v301
    %v611 = vunpack.c.h.b16 %v301
    %v612 = vunpack.c.l.b16 %v302
    %v613 = vunpack.c.h.b16 %v302
    %v614 = vunpack.c.l.b16 %v303
    %v615 = vunpack.c.h.b16 %v303
    %v616 = vunpack.c.l.b16 %v304
    %v617 = vunpack.c.h.b16 %v304
    %v618 = vunpack.c.l.b16 %v305
    %v619 = vunpack.c.h.b16 %v305
    %v620 = vunpack.c.l.b16 %v306
    %v621 = vunpack.c.h.b16 %v306
    %v622 = vunpack.c.l.b16 %v307
    %v623 = vunpack.c.h.b16 %v307
    %v624 = vunpack.c.l.b16 %v308
    %v625 = vunpack.c.h.b16 %v308
    %v626 = vunpack.c.l.b16 %v309
    %v627 = vunpack.c.h.b16 %v309
    %v628 = vunpack.c.l.b16 %v310
    %v629 = vunpack.c.h.b16 %v310
    %v630 = vunpack.c.l.b16 %v311
    %v631 = vunpack.c.h.b16 %v311
    %v632 = vunpack.c.l.b16 %v312
    %v633 = vunpack.c.h.b16 %v312
    %v634 = vunpack.c.l.b16 %v313
    %v635 = vunpack.c.h.b16 %v313
    %v636 = vunpack.c.l.b16 %v314
    %v637 = vunpack.c.h.b16 %v314
    %v638 = vunpack.c.l.b16 %v315
    %v639 = vunpack.c.h.b16 %v315
    %v640 = vunpack.c.l.b16 %v316
    %v641 = vunpack.c.h.b16 %v316
    %v642 = vunpack.c.l.b16 %v317
    %v643 = vunpack.c.h.b16 %v317
    %v644 = vunpack.c.l.b16 %v318
    %v645 = vunpack.c.h.b16 %v318
    %v646 = vunpack.c.l.b16 %v319
    %v647 = vunpack.c.h.b16 %v319
    %v648 = vunpack.c.l.b16 %v320
    %v649 = vunpack.c.h.b16 %v320
    %v650 = vunpack.c.l.b16 %v321
    %v651 = vunpack.c.h.b16 %v321
    %v652 = vunpack.c.l.b16 %v322
    %v653 = vunpack.c.h.b16 %v322
    %v654 = vunpack.c.l.b16 %v323
    %v655 = vunpack.c.h.b16 %v323
    %v656 = vunpack.c.l.b16 %v324
    %v657 = vunpack.c.h.b16 %v324
    %v658 = vunpack.c.l.b16 %v325
    %v659 = vunpack.c.h.b16 %v325
    %v660 = vunpack.c.l.b16 %v326
    %v661 = vunpack.c.h.b16 %v326
    %v662 = vunpack.c.l.b16 %v327
    %v663 = vunpack.c.h.b16 %v327
    %v664 = vunpack.c.l.b16 %v328
    %v665 = vunpack.c.h.b16 %v328
    %v666 = vunpack.c.l.b16 %v329
    %v667 = vunpack.c.h.b16 %v329
    %v668 = vunpack.c.l.b16 %v330
    %v669 = vunpack.c.h.b16 %v330
    %v670 = vunpack.c.l.b16 %v331
    %v671 = vunpack.c.h.b16 %v331
    %v672 = vunpack.c.l.b16 %v332
    %v673 = vunpack.c.h.b16 %v332
    %v674 = vunpack.c.l.b16 %v333
    %v675 = vunpack.c.h.b16 %v333
    %v676 = vunpack.c.l.b16 %v334
    %v677 = vunpack.c.h.b16 %v334
    %v678 = vunpack.c.l.b16 %v335
    %v679 = vunpack.c.h.b16 %v335
    %v680 = vunpack.c.l.b16 %v336
    %v681 = vunpack.c.h.b16 %v336
    %v682 = vunpack.c.l.b16 %v337
    %v683 = vunpack.c.h.b16 %v337
    %v684 = vunpack.c.l.b16 %v338
    %v685 = vunpack.c.h.b16 %v338
    %v686 = vunpack.c.l.b16 %v339
    %v687 = vunpack.c.h.b16 %v339
    %v688 = vunpack.c.l.b16 %v340
    %v689 = vunpack.c.h.b16 %v340
    %v690 = vunpack.c.l.b16 %v341
    %v691 = vunpack.c.h.b16 %v341
    %v692 = vunpack.c.l.b16 %v342
    %v693 = vunpack.c.h.b16 %v342
    %v694 = vunpack.c.l.b16 %v343
    %v695 = vunpack.c.h.b16 %v343
    %v696 = vunpack.c.l.b16 %v344
    %v697 = vunpack.c.h.b16 %v344
    %v698 = vunpack.c.l.b16 %v345
    %v699 = vunpack.c.h.b16 %v345
    %v700 = vunpack.c.l.b16 %v346
    %v701 = vunpack.c.h.b16 %v346
    %v702 = vunpack.c.l.b16 %v347
    %v703 = vunpack.c.h.b16 %v347
    %v704 = vunpack.c.l.b16 %v348
    %v705 = vunpack.c.h.b16 %v348
    %v706 = vunpack.c.l.b16 %v349
    %v707 = vunpack.c.h.b16 %v349
    %v708 = vunpack.c.l.b16 %v350
    %v709 = vunpack.c.h.b16 %v350
    %v710 = vunpack.c.l.b16 %v351
    %v711 = vunpack.c.h.b16 %v351
    %v712 = vunpack.c.l.b16 %v352
    %v713 = vunpack.c.h.b16 %v352
    %v714 = vunpack.c.l.b16 %v353
    %v715 = vunpack.c.h.b16 %v353
    %v716 = vunpack.c.l.b16 %v354
    %v717 = vunpack.c.h.b16 %v354
    %v718 = vunpack.c.l.b16 %v355
    %v719 = vunpack.c.h.b16 %v355
    %v720 = vunpack.c.l.b16 %v356
    %v721 = vunpack.c.h.b16 %v356
    %v722 = vunpack.c.l.b16 %v357
    %v723 = vunpack.c.h.b16 %v357
    %v724 = vunpack.c.l.b16 %v358
    %v725 = vunpack.c.h.b16 %v358
    %v726 = vunpack.c.l.b16 %v359
    %v727 = vunpack.c.h.b16 %v359
    %v728 = vunpack.c.l.b16 %v360
    %v729 = vunpack.c.h.b16 %v360
    %v730 = vunpack.c.l.b16 %v361
    %v731 = vunpack.c.h.b16 %v361
    %v732 = vunpack.c.l.b16 %v362
    %v733 = vunpack.c.h.b16 %v362
    %v734 = vunpack.c.l.b16 %v363
    %v735 = vunpack.c.h.b16 %v363
    %v736 = vunpack.c.l.b16 %v364
    %v737 = vunpack.c.h.b16 %v364
    %v738 = vunpack.c.l.b16 %v365
    %v739 = vunpack.c.h.b16 %v365
    %v740 = vunpack.c.l.b16 %v366
    %v741 = vunpack.c.h.b16 %v366
    %v742 = vunpack.c.l.b16 %v367
    %v743 = vunpack.c.h.b16 %v367
    %v744 = vunpack.c.l.b16 %v368
    %v745 = vunpack.c.h.b16 %v368
    %v746 = vunpack.c.l.b16 %v369
    %v747 = vunpack.c.h.b16 %v369
    %v748 = vunpack.c.l.b16 %v370
    %v749 = vunpack.c.h.b16 %v370
    %v750 = vunpack.c.l.b16 %v371
    %v751 = vunpack.c.h.b16 %v371
    %v752 = vunpack.c.l.b16 %v372
    %v753 = vunpack.c.h.b16 %v372
    %v754 = vunpack.c.l.b16 %v373
    %v755 = vunpack.c.h.b16 %v373
    %v756 = vunpack.c.l.b16 %v374
    %v757 = vunpack.c.h.b16 %v374
    %v758 = vunpack.c.l.b16 %v375
    %v759 = vunpack.c.h.b16 %v375
    %v760 = vunpack.c.l.b16 %v376
    %v761 = vunpack.c.h.b16 %v376
    %v762 = vunpack.c.l.b16 %v377
    %v763 = vunpack.c.h.b16 %v377
    %v764 = vunpack.c.l.b16 %v378
    %v765 = vunpack.c.h.b16 %v378
    %v766 = vunpack.c.l.b16 %v379
    %v767 = vunpack.c.h.b16 %v379
    %v768 = vunpack.c.l.b16 %v380
    %v769 = vunpack.c.h.b16 %v380
    %v770 = vunpack.c.l.b16 %v381
    %v771 = vunpack.c.h.b16 %v381
    %v772 = vunpack.c.l.b16 %v382
    %v773 = vunpack.c.h.b16 %v382
    %v774 = vunpack.c.l.b16 %v383
    %v775 = vunpack.c.h.b16 %v383
    %v776 = vunpack.c.l.b16 %v384
    %v777 = vunpack.c.h.b16 %v384
    %v778 = vunpack.c.l.b16 %v385
    %v779 = vunpack.c.h.b16 %v385
    %v780 = vpack.c.b16 %v528, %v524
    %v781 = vpack.c.b16 %v529, %v525
    %v782 = vpack.c.b16 %v530, %v526
    %v783 = vpack.c.b16 %v531, %v527
    %v784 = vpack.c.b16 %v536, %v532
    %v785 = vpack.c.b16 %v537, %v533
    %v786 = vpack.c.b16 %v538, %v534
    %v787 = vpack.c.b16 %v539, %v535
    %v788 = vpack.c.b16 %v544, %v540
    %v789 = vpack.c.b16 %v545, %v541
    %v790 = vpack.c.b16 %v546, %v542
    %v791 = vpack.c.b16 %v547, %v543
    %v792 = vpack.c.b16 %v552, %v548
    %v793 = vpack.c.b16 %v553, %v549
    %v794 = vpack.c.b16 %v554, %v550
    %v795 = vpack.c.b16 %v555, %v551
    %v796 = vpack.c.b16 %v560, %v556
    %v797 = vpack.c.b16 %v561, %v557
    %v798 = vpack.c.b16 %v562, %v558
    %v799 = vpack.c.b16 %v563, %v559
    %v800 = vpack.c.b16 %v568, %v564
    %v801 = vpack.c.b16 %v569, %v565
    %v802 = vpack.c.b16 %v570, %v566
    %v803 = vpack.c.b16 %v571, %v567
    %v804 = vpack.c.b16 %v576, %v572
    %v805 = vpack.c.b16 %v577, %v573
    %v806 = vpack.c.b16 %v578, %v574
    %v807 = vpack.c.b16 %v579, %v575
    %v808 = vpack.c.b16 %v584, %v580
    %v809 = vpack.c.b16 %v585, %v581
    %v810 = vpack.c.b16 %v586, %v582
    %v811 = vpack.c.b16 %v587, %v583
    %v812 = vpack.c.b16 %v592, %v588
    %v813 = vpack.c.b16 %v593, %v589
    %v814 = vpack.c.b16 %v594, %v590
    %v815 = vpack.c.b16 %v595, %v591
    %v816 = vpack.c.b16 %v600, %v596
    %v817 = vpack.c.b16 %v601, %v597
    %v818 = vpack.c.b16 %v602, %v598
    %v819 = vpack.c.b16 %v603, %v599
    %v820 = vpack.c.b16 %v608, %v604
    %v821 = vpack.c.b16 %v609, %v605
    %v822 = vpack.c.b16 %v610, %v606
    %v823 = vpack.c.b16 %v611, %v607
    %v824 = vpack.c.b16 %v616, %v612
    %v825 = vpack.c.b16 %v617, %v613
    %v826 = vpack.c.b16 %v618, %v614
    %v827 = vpack.c.b16 %v619, %v615
    %v828 = vpack.c.b16 %v624, %v620
    %v829 = vpack.c.b16 %v625, %v621
    %v830 = vpack.c.b16 %v626, %v622
    %v831 = vpack.c.b16 %v627, %v623
    %v832 = vpack.c.b16 %v632, %v628
    %v833 = vpack.c.b16 %v633, %v629
    %v834 = vpack.c.b16 %v634, %v630
    %v835 = vpack.c.b16 %v635, %v631
    %v836 = vpack.c.b16 %v640, %v636
    %v837 = vpack.c.b16 %v641, %v637
    %v838 = vpack.c.b16 %v642, %v638
    %v839 = vpack.c.b16 %v643, %v639
    %v840 = vpack.c.b16 %v648, %v644
    %v841 = vpack.c.b16 %v649, %v645
    %v842 = vpack.c.b16 %v650, %v646
    %v843 = vpack.c.b16 %v651, %v647
    %v844 = vpack.c.b16 %v656, %v652
    %v845 = vpack.c.b16 %v657, %v653
    %v846 = vpack.c.b16 %v658, %v654
    %v847 = vpack.c.b16 %v659, %v655
    %v848 = vpack.c.b16 %v664, %v660
    %v849 = vpack.c.b16 %v665, %v661
    %v850 = vpack.c.b16 %v666, %v662
    %v851 = vpack.c.b16 %v667, %v663
    %v852 = vpack.c.b16 %v672, %v668
    %v853 = vpack.c.b16 %v673, %v669
    %v854 = vpack.c.b16 %v674, %v670
    %v855 = vpack.c.b16 %v675, %v671
    %v856 = vpack.c.b16 %v680, %v676
    %v857 = vpack.c.b16 %v681, %v677
    %v858 = vpack.c.b16 %v682, %v678
    %v859 = vpack.c.b16 %v683, %v679
    %v860 = vpack.c.b16 %v688, %v684
    %v861 = vpack.c.b16 %v689, %v685
    %v862 = vpack.c.b16 %v690, %v686
    %v863 = vpack.c.b16 %v691, %v687
    %v864 = vpack.c.b16 %v696, %v692
    %v865 = vpack.c.b16 %v697, %v693
    %v866 = vpack.c.b16 %v698, %v694
    %v867 = vpack.c.b16 %v699, %v695
    %v868 = vpack.c.b16 %v704, %v700
    %v869 = vpack.c.b16 %v705, %v701
    %v870 = vpack.c.b16 %v706, %v702
    %v871 = vpack.c.b16 %v707, %v703
    %v872 = vpack.c.b16 %v712, %v708
    %v873 = vpack.c.b16 %v713, %v709
    %v874 = vpack.c.b16 %v714, %v710
    %v875 = vpack.c.b16 %v715, %v711
    %v876 = vpack.c.b16 %v720, %v716
    %v877 = vpack.c.b16 %v721, %v717
    %v878 = vpack.c.b16 %v722, %v718
    %v879 = vpack.c.b16 %v723, %v719
    %v880 = vpack.c.b16 %v728, %v724
    %v881 = vpack.c.b16 %v729, %v725
    %v882 = vpack.c.b16 %v730, %v726
    %v883 = vpack.c.b16 %v731, %v727
    %v884 = vpack.c.b16 %v736, %v732
    %v885 = vpack.c.b16 %v737, %v733
    %v886 = vpack.c.b16 %v738, %v734
    %v887 = vpack.c.b16 %v739, %v735
    %v888 = vpack.c.b16 %v744, %v740
    %v889 = vpack.c.b16 %v745, %v741
    %v890 = vpack.c.b16 %v746, %v742
    %v891 = vpack.c.b16 %v747, %v743
    %v892 = vpack.c.b16 %v752, %v748
    %v893 = vpack.c.b16 %v753, %v749
    %v894 = vpack.c.b16 %v754, %v750
    %v895 = vpack.c.b16 %v755, %v751
    %v896 = vpack.c.b16 %v760, %v756
    %v897 = vpack.c.b16 %v761, %v757
    %v898 = vpack.c.b16 %v762, %v758
    %v899 = vpack.c.b16 %v763, %v759
    %v900 = vpack.c.b16 %v768, %v764
    %v901 = vpack.c.b16 %v769, %v765
    %v902 = vpack.c.b16 %v770, %v766
    %v903 = vpack.c.b16 %v771, %v767
    %v904 = vpack.c.b16 %v776, %v772
    %v905 = vpack.c.b16 %v777, %v773
    %v906 = vpack.c.b16 %v778, %v774
    %v907 = vpack.c.b16 %v779, %v775
    %1036 = vmatpush.bf16.msra.mxu0 %v808
    %1037 = vmatpush.bf16.msra.mxu0 %v804
    %1038 = vmatpush.bf16.msra.mxu0 %v800
    %1039 = vmatpush.bf16.msra.mxu0 %v796
    %1040 = vmatpush.bf16.msra.mxu0 %v792
    %1041 = vmatpush.bf16.msra.mxu0 %v788
    %1042 = vmatpush.bf16.msra.mxu0 %v784
    %1043 = vmatpush.bf16.msra.mxu0 %v780
    %1044 = vmatmul.bf16.gmra.mxu0 %v254
    %v1045 = vpop.f32.mrf.mxu0
    %v1046 = vadd.f32 %v388, %v1045
    %v1047 = vpop.f32.mrf.mxu0
    %1048 = vdwg.mxu0
    %1049 = vmatpush.bf16.msra.mxu0 %v840
    %1050 = vmatpush.bf16.msra.mxu0 %v836
    %1051 = vmatpush.bf16.msra.mxu0 %v832
    %1052 = vmatpush.bf16.msra.mxu0 %v828
    %1053 = vmatpush.bf16.msra.mxu0 %v824
    %1054 = vmatpush.bf16.msra.mxu0 %v820
    %1055 = vmatpush.bf16.msra.mxu0 %v816
    %1056 = vmatpush.bf16.msra.mxu0 %v812
    %1057 = vmatmul.bf16.gmra.mxu0 %v255
    %v1058 = vpop.f32.mrf.mxu0
    %v1059 = vadd.f32 %v1046, %v1058
    %v1060 = vpop.f32.mrf.mxu0
    %1061 = vdwg.mxu0
    %1062 = vmatpush.bf16.msra.mxu0 %v872
    %1063 = vmatpush.bf16.msra.mxu0 %v868
    %1064 = vmatpush.bf16.msra.mxu0 %v864
    %1065 = vmatpush.bf16.msra.mxu0 %v860
    %1066 = vmatpush.bf16.msra.mxu0 %v856
    %1067 = vmatpush.bf16.msra.mxu0 %v852
    %1068 = vmatpush.bf16.msra.mxu0 %v848
    %1069 = vmatpush.bf16.msra.mxu0 %v844
    %1070 = vmatmul.bf16.gmra.mxu0 %v256
    %v1071 = vpop.f32.mrf.mxu0
    %v1072 = vadd.f32 %v1059, %v1071
    %v1073 = vpop.f32.mrf.mxu0
    %1074 = vdwg.mxu0
    %1075 = vmatpush.bf16.msra.mxu0 %v904
    %1076 = vmatpush.bf16.msra.mxu0 %v900
    %1077 = vmatpush.bf16.msra.mxu0 %v896
    %1078 = vmatpush.bf16.msra.mxu0 %v892
    %1079 = vmatpush.bf16.msra.mxu0 %v888
    %1080 = vmatpush.bf16.msra.mxu0 %v884
    %1081 = vmatpush.bf16.msra.mxu0 %v880
    %1082 = vmatpush.bf16.msra.mxu0 %v876
    %1083 = vmatmul.bf16.gmra.mxu0 %v257
    %v1084 = vpop.f32.mrf.mxu0
    %v1085 = vadd.f32 %v1072, %v1084
    %v1086 = vpop.f32.mrf.mxu0
    %1087 = vdwg.mxu0
    %1088 = vmatpush.bf16.msra.mxu0 %v809
    %1089 = vmatpush.bf16.msra.mxu0 %v805
    %1090 = vmatpush.bf16.msra.mxu0 %v801
    %1091 = vmatpush.bf16.msra.mxu0 %v797
    %1092 = vmatpush.bf16.msra.mxu0 %v793
    %1093 = vmatpush.bf16.msra.mxu0 %v789
    %1094 = vmatpush.bf16.msra.mxu0 %v785
    %1095 = vmatpush.bf16.msra.mxu0 %v781
    %1096 = vmatmul.bf16.gmra.mxu0 %v254
    %v1097 = vpop.f32.mrf.mxu0
    %v1098 = vadd.f32 %v389, %v1097
    %v1099 = vpop.f32.mrf.mxu0
    %1100 = vdwg.mxu0
    %1101 = vmatpush.bf16.msra.mxu0 %v841
    %1102 = vmatpush.bf16.msra.mxu0 %v837
    %1103 = vmatpush.bf16.msra.mxu0 %v833
    %1104 = vmatpush.bf16.msra.mxu0 %v829
    %1105 = vmatpush.bf16.msra.mxu0 %v825
    %1106 = vmatpush.bf16.msra.mxu0 %v821
    %1107 = vmatpush.bf16.msra.mxu0 %v817
    %1108 = vmatpush.bf16.msra.mxu0 %v813
    %1109 = vmatmul.bf16.gmra.mxu0 %v255
    %v1110 = vpop.f32.mrf.mxu0
    %v1111 = vadd.f32 %v1098, %v1110
    %v1112 = vpop.f32.mrf.mxu0
    %1113 = vdwg.mxu0
    %1114 = vmatpush.bf16.msra.mxu0 %v873
    %1115 = vmatpush.bf16.msra.mxu0 %v869
    %1116 = vmatpush.bf16.msra.mxu0 %v865
    %1117 = vmatpush.bf16.msra.mxu0 %v861
    %1118 = vmatpush.bf16.msra.mxu0 %v857
    %1119 = vmatpush.bf16.msra.mxu0 %v853
    %1120 = vmatpush.bf16.msra.mxu0 %v849
    %1121 = vmatpush.bf16.msra.mxu0 %v845
    %1122 = vmatmul.bf16.gmra.mxu0 %v256
    %v1123 = vpop.f32.mrf.mxu0
    %v1124 = vadd.f32 %v1111, %v1123
    %v1125 = vpop.f32.mrf.mxu0
    %1126 = vdwg.mxu0
    %1127 = vmatpush.bf16.msra.mxu0 %v905
    %1128 = vmatpush.bf16.msra.mxu0 %v901
    %1129 = vmatpush.bf16.msra.mxu0 %v897
    %1130 = vmatpush.bf16.msra.mxu0 %v893
    %1131 = vmatpush.bf16.msra.mxu0 %v889
    %1132 = vmatpush.bf16.msra.mxu0 %v885
    %1133 = vmatpush.bf16.msra.mxu0 %v881
    %1134 = vmatpush.bf16.msra.mxu0 %v877
    %1135 = vmatmul.bf16.gmra.mxu0 %v257
    %v1136 = vpop.f32.mrf.mxu0
    %v1137 = vadd.f32 %v1124, %v1136
    %v1138 = vpop.f32.mrf.mxu0
    %1139 = vdwg.mxu0
    %1140 = vmatpush.bf16.msra.mxu0 %v810
    %1141 = vmatpush.bf16.msra.mxu0 %v806
    %1142 = vmatpush.bf16.msra.mxu0 %v802
    %1143 = vmatpush.bf16.msra.mxu0 %v798
    %1144 = vmatpush.bf16.msra.mxu0 %v794
    %1145 = vmatpush.bf16.msra.mxu0 %v790
    %1146 = vmatpush.bf16.msra.mxu0 %v786
    %1147 = vmatpush.bf16.msra.mxu0 %v782
    %1148 = vmatmul.bf16.gmra.mxu0 %v254
    %v1149 = vpop.f32.mrf.mxu0
    %v1150 = vadd.f32 %v390, %v1149
    %v1151 = vpop.f32.mrf.mxu0
    %1152 = vdwg.mxu0
    %1153 = vmatpush.bf16.msra.mxu0 %v842
    %1154 = vmatpush.bf16.msra.mxu0 %v838
    %1155 = vmatpush.bf16.msra.mxu0 %v834
    %1156 = vmatpush.bf16.msra.mxu0 %v830
    %1157 = vmatpush.bf16.msra.mxu0 %v826
    %1158 = vmatpush.bf16.msra.mxu0 %v822
    %1159 = vmatpush.bf16.msra.mxu0 %v818
    %1160 = vmatpush.bf16.msra.mxu0 %v814
    %1161 = vmatmul.bf16.gmra.mxu0 %v255
    %v1162 = vpop.f32.mrf.mxu0
    %v1163 = vadd.f32 %v1150, %v1162
    %v1164 = vpop.f32.mrf.mxu0
    %1165 = vdwg.mxu0
    %1166 = vmatpush.bf16.msra.mxu0 %v874
    %1167 = vmatpush.bf16.msra.mxu0 %v870
    %1168 = vmatpush.bf16.msra.mxu0 %v866
    %1169 = vmatpush.bf16.msra.mxu0 %v862
    %1170 = vmatpush.bf16.msra.mxu0 %v858
    %1171 = vmatpush.bf16.msra.mxu0 %v854
    %1172 = vmatpush.bf16.msra.mxu0 %v850
    %1173 = vmatpush.bf16.msra.mxu0 %v846
    %1174 = vmatmul.bf16.gmra.mxu0 %v256
    %v1175 = vpop.f32.mrf.mxu0
    %v1176 = vadd.f32 %v1163, %v1175
    %v1177 = vpop.f32.mrf.mxu0
    %1178 = vdwg.mxu0
    %1179 = vmatpush.bf16.msra.mxu0 %v906
    %1180 = vmatpush.bf16.msra.mxu0 %v902
    %1181 = vmatpush.bf16.msra.mxu0 %v898
    %1182 = vmatpush.bf16.msra.mxu0 %v894
    %1183 = vmatpush.bf16.msra.mxu0 %v890
    %1184 = vmatpush.bf16.msra.mxu0 %v886
    %1185 = vmatpush.bf16.msra.mxu0 %v882
    %1186 = vmatpush.bf16.msra.mxu0 %v878
    %1187 = vmatmul.bf16.gmra.mxu0 %v257
    %v1188 = vpop.f32.mrf.mxu0
    %v1189 = vadd.f32 %v1176, %v1188
    %v1190 = vpop.f32.mrf.mxu0
    %1191 = vdwg.mxu0
    %1192 = vmatpush.bf16.msra.mxu0 %v811
    %1193 = vmatpush.bf16.msra.mxu0 %v807
    %1194 = vmatpush.bf16.msra.mxu0 %v803
    %1195 = vmatpush.bf16.msra.mxu0 %v799
    %1196 = vmatpush.bf16.msra.mxu0 %v795
    %1197 = vmatpush.bf16.msra.mxu0 %v791
    %1198 = vmatpush.bf16.msra.mxu0 %v787
    %1199 = vmatpush.bf16.msra.mxu0 %v783
    %1200 = vmatmul.bf16.gmra.mxu0 %v254
    %v1201 = vpop.f32.mrf.mxu0
    %v1202 = vadd.f32 %v391, %v1201
    %v1203 = vpop.f32.mrf.mxu0
    %1204 = vdwg.mxu0
    %1205 = vmatpush.bf16.msra.mxu0 %v843
    %1206 = vmatpush.bf16.msra.mxu0 %v839
    %1207 = vmatpush.bf16.msra.mxu0 %v835
    %1208 = vmatpush.bf16.msra.mxu0 %v831
    %1209 = vmatpush.bf16.msra.mxu0 %v827
    %1210 = vmatpush.bf16.msra.mxu0 %v823
    %1211 = vmatpush.bf16.msra.mxu0 %v819
    %1212 = vmatpush.bf16.msra.mxu0 %v815
    %1213 = vmatmul.bf16.gmra.mxu0 %v255
    %v1214 = vpop.f32.mrf.mxu0
    %v1215 = vadd.f32 %v1202, %v1214
    %v1216 = vpop.f32.mrf.mxu0
    %1217 = vdwg.mxu0
    %1218 = vmatpush.bf16.msra.mxu0 %v875
    %1219 = vmatpush.bf16.msra.mxu0 %v871
    %1220 = vmatpush.bf16.msra.mxu0 %v867
    %1221 = vmatpush.bf16.msra.mxu0 %v863
    %1222 = vmatpush.bf16.msra.mxu0 %v859
    %1223 = vmatpush.bf16.msra.mxu0 %v855
    %1224 = vmatpush.bf16.msra.mxu0 %v851
    %1225 = vmatpush.bf16.msra.mxu0 %v847
    %1226 = vmatmul.bf16.gmra.mxu0 %v256
    %v1227 = vpop.f32.mrf.mxu0
    %v1228 = vadd.f32 %v1215, %v1227
    %v1229 = vpop.f32.mrf.mxu0
    %1230 = vdwg.mxu0
    %1231 = vmatpush.bf16.msra.mxu0 %v907
    %1232 = vmatpush.bf16.msra.mxu0 %v903
    %1233 = vmatpush.bf16.msra.mxu0 %v899
    %1234 = vmatpush.bf16.msra.mxu0 %v895
    %1235 = vmatpush.bf16.msra.mxu0 %v891
    %1236 = vmatpush.bf16.msra.mxu0 %v887
    %1237 = vmatpush.bf16.msra.mxu0 %v883
    %1238 = vmatpush.bf16.msra.mxu0 %v879
    %1239 = vmatmul.bf16.gmra.mxu0 %v257
    %v1240 = vpop.f32.mrf.mxu0
    %v1241 = vadd.f32 %v1228, %v1240
    %v1242 = vpop.f32.mrf.mxu0
    %1243 = vdwg.mxu0
    %v1244 = vmax.f32 %v1085, 0.0
    %v1245 = vmax.f32 %v1137, 0.0
    %v1246 = vmax.f32 %v1189, 0.0
    %v1247 = vmax.f32 %v1241, 0.0
    %v1248 = vpack.c.bf16 %v1244, %v1244
    %v1249 = vpack.c.bf16 %v1245, %v1245
    %v1250 = vpack.c.bf16 %v1246, %v1246
    %v1251 = vpack.c.bf16 %v1247, %v1247
    %v1252 = vld [vmem:[#allocation11] sm:$0xff]
    %v1253 = vld [vmem:[#allocation11 + $0x8] sm:$0xf]
    %v1254 = vld [vmem:[#allocation11 + $0xc] sm:$0xff]
    %v1255 = vld [vmem:[#allocation11 + $0x14] sm:$0xf]
    %v1256 = vld [vmem:[#allocation11 + $0x18] sm:$0xff]
    %v1257 = vld [vmem:[#allocation11 + $0x20] sm:$0xf]
    %v1258 = vld [vmem:[#allocation11 + $0x24] sm:$0xff]
    %v1259 = vld [vmem:[#allocation11 + $0x2c] sm:$0xf]
    %v1260 = vld [vmem:[#allocation11 + $0x30] sm:$0xff]
    %v1261 = vld [vmem:[#allocation11 + $0x38] sm:$0xf]
    %v1262 = vld [vmem:[#allocation11 + $0x3c] sm:$0xff]
    %v1263 = vld [vmem:[#allocation11 + $0x44] sm:$0xf]
    %v1264 = vld [vmem:[#allocation11 + $0x48] sm:$0xff]
    %v1265 = vld [vmem:[#allocation11 + $0x50] sm:$0xf]
    %v1266 = vld [vmem:[#allocation11 + $0x54] sm:$0xff]
    %v1267 = vld [vmem:[#allocation11 + $0x5c] sm:$0xf]
    %v1268 = vld [vmem:[#allocation11 + $0x60] sm:$0xff]
    %v1269 = vld [vmem:[#allocation11 + $0x68] sm:$0xf]
    %v1270 = vld [vmem:[#allocation11 + $0x6c] sm:$0xff]
    %v1271 = vld [vmem:[#allocation11 + $0x74] sm:$0xf]
    %v1272 = vld [vmem:[#allocation11 + $0x78] sm:$0xff]
    %v1273 = vld [vmem:[#allocation11 + $0x80] sm:$0xf]
    %v1274 = vld [vmem:[#allocation11 + $0x84] sm:$0xff]
    %v1275 = vld [vmem:[#allocation11 + $0x8c] sm:$0xf]
    %v1276 = vld [vmem:[#allocation11 + $0x90] sm:$0xff]
    %v1277 = vld [vmem:[#allocation11 + $0x98] sm:$0xf]
    %v1278 = vld [vmem:[#allocation11 + $0x9c] sm:$0xff]
    %v1279 = vld [vmem:[#allocation11 + $0xa4] sm:$0xf]
    %v1280 = vld [vmem:[#allocation11 + $0xa8] sm:$0xff]
    %v1281 = vld [vmem:[#allocation11 + $0xb0] sm:$0xf]
    %v1282 = vld [vmem:[#allocation11 + $0xb4] sm:$0xff]
    %v1283 = vld [vmem:[#allocation11 + $0xbc] sm:$0xf]
    %v1284 = vld [vmem:[#allocation11 + $0xc0] sm:$0xff]
    %v1285 = vld [vmem:[#allocation11 + $0xc8] sm:$0xf]
    %v1286 = vld [vmem:[#allocation11 + $0xcc] sm:$0xff]
    %v1287 = vld [vmem:[#allocation11 + $0xd4] sm:$0xf]
    %v1288 = vld [vmem:[#allocation11 + $0xd8] sm:$0xff]
    %v1289 = vld [vmem:[#allocation11 + $0xe0] sm:$0xf]
    %v1290 = vld [vmem:[#allocation11 + $0xe4] sm:$0xff]
    %v1291 = vld [vmem:[#allocation11 + $0xec] sm:$0xf]
    %v1292 = vld [vmem:[#allocation11 + $0xf0] sm:$0xff]
    %v1293 = vld [vmem:[#allocation11 + $0xf8] sm:$0xf]
    %v1294 = vld [vmem:[#allocation11 + $0xfc] sm:$0xff]
    %v1295 = vld [vmem:[#allocation11 + $0x104] sm:$0xf]
    %v1296 = vld [vmem:[#allocation11 + $0x108] sm:$0xff]
    %v1297 = vld [vmem:[#allocation11 + $0x110] sm:$0xf]
    %v1298 = vld [vmem:[#allocation11 + $0x114] sm:$0xff]
    %v1299 = vld [vmem:[#allocation11 + $0x11c] sm:$0xf]
    %v1300 = vld [vmem:[#allocation11 + $0x120] sm:$0xff]
    %v1301 = vld [vmem:[#allocation11 + $0x128] sm:$0xf]
    %v1302 = vld [vmem:[#allocation11 + $0x12c] sm:$0xff]
    %v1303 = vld [vmem:[#allocation11 + $0x134] sm:$0xf]
    %v1304 = vld [vmem:[#allocation11 + $0x138] sm:$0xff]
    %v1305 = vld [vmem:[#allocation11 + $0x140] sm:$0xf]
    %v1306 = vld [vmem:[#allocation11 + $0x144] sm:$0xff]
    %v1307 = vld [vmem:[#allocation11 + $0x14c] sm:$0xf]
    %v1308 = vld [vmem:[#allocation11 + $0x150] sm:$0xff]
    %v1309 = vld [vmem:[#allocation11 + $0x158] sm:$0xf]
    %v1310 = vld [vmem:[#allocation11 + $0x15c] sm:$0xff]
    %v1311 = vld [vmem:[#allocation11 + $0x164] sm:$0xf]
    %v1312 = vld [vmem:[#allocation11 + $0x168] sm:$0xff]
    %v1313 = vld [vmem:[#allocation11 + $0x170] sm:$0xf]
    %v1314 = vld [vmem:[#allocation11 + $0x174] sm:$0xff]
    %v1315 = vld [vmem:[#allocation11 + $0x17c] sm:$0xf]
    %v1316 = vld [vmem:[#allocation11 + $0x180] sm:$0xff]
    %v1317 = vld [vmem:[#allocation11 + $0x188] sm:$0xf]
    %v1318 = vld [vmem:[#allocation11 + $0x18c] sm:$0xff]
    %v1319 = vld [vmem:[#allocation11 + $0x194] sm:$0xf]
    %v1320 = vld [vmem:[#allocation11 + $0x198] sm:$0xff]
    %v1321 = vld [vmem:[#allocation11 + $0x1a0] sm:$0xf]
    %v1322 = vld [vmem:[#allocation11 + $0x1a4] sm:$0xff]
    %v1323 = vld [vmem:[#allocation11 + $0x1ac] sm:$0xf]
    %v1324 = vld [vmem:[#allocation11 + $0x1b0] sm:$0xff]
    %v1325 = vld [vmem:[#allocation11 + $0x1b8] sm:$0xf]
    %v1326 = vld [vmem:[#allocation11 + $0x1bc] sm:$0xff]
    %v1327 = vld [vmem:[#allocation11 + $0x1c4] sm:$0xf]
    %v1328 = vld [vmem:[#allocation11 + $0x1c8] sm:$0xff]
    %v1329 = vld [vmem:[#allocation11 + $0x1d0] sm:$0xf]
    %v1330 = vld [vmem:[#allocation11 + $0x1d4] sm:$0xff]
    %v1331 = vld [vmem:[#allocation11 + $0x1dc] sm:$0xf]
    %v1332 = vld [vmem:[#allocation11 + $0x1e0] sm:$0xff]
    %v1333 = vld [vmem:[#allocation11 + $0x1e8] sm:$0xf]
    %v1334 = vld [vmem:[#allocation11 + $0x1ec] sm:$0xff]
    %v1335 = vld [vmem:[#allocation11 + $0x1f4] sm:$0xf]
    %v1336 = vld [vmem:[#allocation11 + $0x1f8] sm:$0xff]
    %v1337 = vld [vmem:[#allocation11 + $0x200] sm:$0xf]
    %v1338 = vld [vmem:[#allocation11 + $0x204] sm:$0xff]
    %v1339 = vld [vmem:[#allocation11 + $0x20c] sm:$0xf]
    %v1340 = vld [vmem:[#allocation11 + $0x210] sm:$0xff]
    %v1341 = vld [vmem:[#allocation11 + $0x218] sm:$0xf]
    %v1342 = vld [vmem:[#allocation11 + $0x21c] sm:$0xff]
    %v1343 = vld [vmem:[#allocation11 + $0x224] sm:$0xf]
    %v1344 = vld [vmem:[#allocation11 + $0x228] sm:$0xff]
    %v1345 = vld [vmem:[#allocation11 + $0x230] sm:$0xf]
    %v1346 = vld [vmem:[#allocation11 + $0x234] sm:$0xff]
    %v1347 = vld [vmem:[#allocation11 + $0x23c] sm:$0xf]
    %v1348 = vld [vmem:[#allocation11 + $0x240] sm:$0xff]
    %v1349 = vld [vmem:[#allocation11 + $0x248] sm:$0xf]
    %v1350 = vld [vmem:[#allocation11 + $0x24c] sm:$0xff]
    %v1351 = vld [vmem:[#allocation11 + $0x254] sm:$0xf]
    %v1352 = vld [vmem:[#allocation11 + $0x258] sm:$0xff]
    %v1353 = vld [vmem:[#allocation11 + $0x260] sm:$0xf]
    %v1354 = vld [vmem:[#allocation11 + $0x264] sm:$0xff]
    %v1355 = vld [vmem:[#allocation11 + $0x26c] sm:$0xf]
    %v1356 = vld [vmem:[#allocation11 + $0x270] sm:$0xff]
    %v1357 = vld [vmem:[#allocation11 + $0x278] sm:$0xf]
    %v1358 = vld [vmem:[#allocation11 + $0x27c] sm:$0xff]
    %v1359 = vld [vmem:[#allocation11 + $0x284] sm:$0xf]
    %v1360 = vld [vmem:[#allocation11 + $0x288] sm:$0xff]
    %v1361 = vld [vmem:[#allocation11 + $0x290] sm:$0xf]
    %v1362 = vld [vmem:[#allocation11 + $0x294] sm:$0xff]
    %v1363 = vld [vmem:[#allocation11 + $0x29c] sm:$0xf]
    %v1364 = vld [vmem:[#allocation11 + $0x2a0] sm:$0xff]
    %v1365 = vld [vmem:[#allocation11 + $0x2a8] sm:$0xf]
    %v1366 = vld [vmem:[#allocation11 + $0x2ac] sm:$0xff]
    %v1367 = vld [vmem:[#allocation11 + $0x2b4] sm:$0xf]
    %v1368 = vld [vmem:[#allocation11 + $0x2b8] sm:$0xff]
    %v1369 = vld [vmem:[#allocation11 + $0x2c0] sm:$0xf]
    %v1370 = vld [vmem:[#allocation11 + $0x2c4] sm:$0xff]
    %v1371 = vld [vmem:[#allocation11 + $0x2cc] sm:$0xf]
    %v1372 = vld [vmem:[#allocation11 + $0x2d0] sm:$0xff]
    %v1373 = vld [vmem:[#allocation11 + $0x2d8] sm:$0xf]
    %v1374 = vld [vmem:[#allocation11 + $0x2dc] sm:$0xff]
    %v1375 = vld [vmem:[#allocation11 + $0x2e4] sm:$0xf]
    %v1376 = vld [vmem:[#allocation11 + $0x2e8] sm:$0xff]
    %v1377 = vld [vmem:[#allocation11 + $0x2f0] sm:$0xf]
    %v1378 = vld [vmem:[#allocation11 + $0x2f4] sm:$0xff]
    %v1379 = vld [vmem:[#allocation11 + $0x2fc] sm:$0xf]
    %v1380 = vld [vmem:[%s6] sm:$0x7]
    %v1382 = vperm.slane %v1380, 0
    %v1383 = vperm.slane %v1380, 1
    %v1384 = vperm.slane %v1380, 2
    %v1516 = vunpack.c.l.b16 %v1252
    %v1517 = vunpack.c.h.b16 %v1252
    %v1518 = vunpack.c.l.b16 %v1253
    %v1519 = vunpack.c.l.b16 %v1254
    %v1520 = vunpack.c.h.b16 %v1254
    %v1521 = vunpack.c.l.b16 %v1255
    %v1522 = vunpack.c.l.b16 %v1256
    %v1523 = vunpack.c.h.b16 %v1256
    %v1524 = vunpack.c.l.b16 %v1257
    %v1525 = vunpack.c.l.b16 %v1258
    %v1526 = vunpack.c.h.b16 %v1258
    %v1527 = vunpack.c.l.b16 %v1259
    %v1528 = vunpack.c.l.b16 %v1260
    %v1529 = vunpack.c.h.b16 %v1260
    %v1530 = vunpack.c.l.b16 %v1261
    %v1531 = vunpack.c.l.b16 %v1262
    %v1532 = vunpack.c.h.b16 %v1262
    %v1533 = vunpack.c.l.b16 %v1263
    %v1534 = vunpack.c.l.b16 %v1264
    %v1535 = vunpack.c.h.b16 %v1264
    %v1536 = vunpack.c.l.b16 %v1265
    %v1537 = vunpack.c.l.b16 %v1266
    %v1538 = vunpack.c.h.b16 %v1266
    %v1539 = vunpack.c.l.b16 %v1267
    %v1540 = vunpack.c.l.b16 %v1268
    %v1541 = vunpack.c.h.b16 %v1268
    %v1542 = vunpack.c.l.b16 %v1269
    %v1543 = vunpack.c.l.b16 %v1270
    %v1544 = vunpack.c.h.b16 %v1270
    %v1545 = vunpack.c.l.b16 %v1271
    %v1546 = vunpack.c.l.b16 %v1272
    %v1547 = vunpack.c.h.b16 %v1272
    %v1548 = vunpack.c.l.b16 %v1273
    %v1549 = vunpack.c.l.b16 %v1274
    %v1550 = vunpack.c.h.b16 %v1274
    %v1551 = vunpack.c.l.b16 %v1275
    %v1552 = vunpack.c.l.b16 %v1276
    %v1553 = vunpack.c.h.b16 %v1276
    %v1554 = vunpack.c.l.b16 %v1277
    %v1555 = vunpack.c.l.b16 %v1278
    %v1556 = vunpack.c.h.b16 %v1278
    %v1557 = vunpack.c.l.b16 %v1279
    %v1558 = vunpack.c.l.b16 %v1280
    %v1559 = vunpack.c.h.b16 %v1280
    %v1560 = vunpack.c.l.b16 %v1281
    %v1561 = vunpack.c.l.b16 %v1282
    %v1562 = vunpack.c.h.b16 %v1282
    %v1563 = vunpack.c.l.b16 %v1283
    %v1564 = vunpack.c.l.b16 %v1284
    %v1565 = vunpack.c.h.b16 %v1284
    %v1566 = vunpack.c.l.b16 %v1285
    %v1567 = vunpack.c.l.b16 %v1286
    %v1568 = vunpack.c.h.b16 %v1286
    %v1569 = vunpack.c.l.b16 %v1287
    %v1570 = vunpack.c.l.b16 %v1288
    %v1571 = vunpack.c.h.b16 %v1288
    %v1572 = vunpack.c.l.b16 %v1289
    %v1573 = vunpack.c.l.b16 %v1290
    %v1574 = vunpack.c.h.b16 %v1290
    %v1575 = vunpack.c.l.b16 %v1291
    %v1576 = vunpack.c.l.b16 %v1292
    %v1577 = vunpack.c.h.b16 %v1292
    %v1578 = vunpack.c.l.b16 %v1293
    %v1579 = vunpack.c.l.b16 %v1294
    %v1580 = vunpack.c.h.b16 %v1294
    %v1581 = vunpack.c.l.b16 %v1295
    %v1582 = vunpack.c.l.b16 %v1296
    %v1583 = vunpack.c.h.b16 %v1296
    %v1584 = vunpack.c.l.b16 %v1297
    %v1585 = vunpack.c.l.b16 %v1298
    %v1586 = vunpack.c.h.b16 %v1298
    %v1587 = vunpack.c.l.b16 %v1299
    %v1588 = vunpack.c.l.b16 %v1300
    %v1589 = vunpack.c.h.b16 %v1300
    %v1590 = vunpack.c.l.b16 %v1301
    %v1591 = vunpack.c.l.b16 %v1302
    %v1592 = vunpack.c.h.b16 %v1302
    %v1593 = vunpack.c.l.b16 %v1303
    %v1594 = vunpack.c.l.b16 %v1304
    %v1595 = vunpack.c.h.b16 %v1304
    %v1596 = vunpack.c.l.b16 %v1305
    %v1597 = vunpack.c.l.b16 %v1306
    %v1598 = vunpack.c.h.b16 %v1306
    %v1599 = vunpack.c.l.b16 %v1307
    %v1600 = vunpack.c.l.b16 %v1308
    %v1601 = vunpack.c.h.b16 %v1308
    %v1602 = vunpack.c.l.b16 %v1309
    %v1603 = vunpack.c.l.b16 %v1310
    %v1604 = vunpack.c.h.b16 %v1310
    %v1605 = vunpack.c.l.b16 %v1311
    %v1606 = vunpack.c.l.b16 %v1312
    %v1607 = vunpack.c.h.b16 %v1312
    %v1608 = vunpack.c.l.b16 %v1313
    %v1609 = vunpack.c.l.b16 %v1314
    %v1610 = vunpack.c.h.b16 %v1314
    %v1611 = vunpack.c.l.b16 %v1315
    %v1612 = vunpack.c.l.b16 %v1316
    %v1613 = vunpack.c.h.b16 %v1316
    %v1614 = vunpack.c.l.b16 %v1317
    %v1615 = vunpack.c.l.b16 %v1318
    %v1616 = vunpack.c.h.b16 %v1318
    %v1617 = vunpack.c.l.b16 %v1319
    %v1618 = vunpack.c.l.b16 %v1320
    %v1619 = vunpack.c.h.b16 %v1320
    %v1620 = vunpack.c.l.b16 %v1321
    %v1621 = vunpack.c.l.b16 %v1322
    %v1622 = vunpack.c.h.b16 %v1322
    %v1623 = vunpack.c.l.b16 %v1323
    %v1624 = vunpack.c.l.b16 %v1324
    %v1625 = vunpack.c.h.b16 %v1324
    %v1626 = vunpack.c.l.b16 %v1325
    %v1627 = vunpack.c.l.b16 %v1326
    %v1628 = vunpack.c.h.b16 %v1326
    %v1629 = vunpack.c.l.b16 %v1327
    %v1630 = vunpack.c.l.b16 %v1328
    %v1631 = vunpack.c.h.b16 %v1328
    %v1632 = vunpack.c.l.b16 %v1329
    %v1633 = vunpack.c.l.b16 %v1330
    %v1634 = vunpack.c.h.b16 %v1330
    %v1635 = vunpack.c.l.b16 %v1331
    %v1636 = vunpack.c.l.b16 %v1332
    %v1637 = vunpack.c.h.b16 %v1332
    %v1638 = vunpack.c.l.b16 %v1333
    %v1639 = vunpack.c.l.b16 %v1334
    %v1640 = vunpack.c.h.b16 %v1334
    %v1641 = vunpack.c.l.b16 %v1335
    %v1642 = vunpack.c.l.b16 %v1336
    %v1643 = vunpack.c.h.b16 %v1336
    %v1644 = vunpack.c.l.b16 %v1337
    %v1645 = vunpack.c.l.b16 %v1338
    %v1646 = vunpack.c.h.b16 %v1338
    %v1647 = vunpack.c.l.b16 %v1339
    %v1648 = vunpack.c.l.b16 %v1340
    %v1649 = vunpack.c.h.b16 %v1340
    %v1650 = vunpack.c.l.b16 %v1341
    %v1651 = vunpack.c.l.b16 %v1342
    %v1652 = vunpack.c.h.b16 %v1342
    %v1653 = vunpack.c.l.b16 %v1343
    %v1654 = vunpack.c.l.b16 %v1344
    %v1655 = vunpack.c.h.b16 %v1344
    %v1656 = vunpack.c.l.b16 %v1345
    %v1657 = vunpack.c.l.b16 %v1346
    %v1658 = vunpack.c.h.b16 %v1346
    %v1659 = vunpack.c.l.b16 %v1347
    %v1660 = vunpack.c.l.b16 %v1348
    %v1661 = vunpack.c.h.b16 %v1348
    %v1662 = vunpack.c.l.b16 %v1349
    %v1663 = vunpack.c.l.b16 %v1350
    %v1664 = vunpack.c.h.b16 %v1350
    %v1665 = vunpack.c.l.b16 %v1351
    %v1666 = vunpack.c.l.b16 %v1352
    %v1667 = vunpack.c.h.b16 %v1352
    %v1668 = vunpack.c.l.b16 %v1353
    %v1669 = vunpack.c.l.b16 %v1354
    %v1670 = vunpack.c.h.b16 %v1354
    %v1671 = vunpack.c.l.b16 %v1355
    %v1672 = vunpack.c.l.b16 %v1356
    %v1673 = vunpack.c.h.b16 %v1356
    %v1674 = vunpack.c.l.b16 %v1357
    %v1675 = vunpack.c.l.b16 %v1358
    %v1676 = vunpack.c.h.b16 %v1358
    %v1677 = vunpack.c.l.b16 %v1359
    %v1678 = vunpack.c.l.b16 %v1360
    %v1679 = vunpack.c.h.b16 %v1360
    %v1680 = vunpack.c.l.b16 %v1361
    %v1681 = vunpack.c.l.b16 %v1362
    %v1682 = vunpack.c.h.b16 %v1362
    %v1683 = vunpack.c.l.b16 %v1363
    %v1684 = vunpack.c.l.b16 %v1364
    %v1685 = vunpack.c.h.b16 %v1364
    %v1686 = vunpack.c.l.b16 %v1365
    %v1687 = vunpack.c.l.b16 %v1366
    %v1688 = vunpack.c.h.b16 %v1366
    %v1689 = vunpack.c.l.b16 %v1367
    %v1690 = vunpack.c.l.b16 %v1368
    %v1691 = vunpack.c.h.b16 %v1368
    %v1692 = vunpack.c.l.b16 %v1369
    %v1693 = vunpack.c.l.b16 %v1370
    %v1694 = vunpack.c.h.b16 %v1370
    %v1695 = vunpack.c.l.b16 %v1371
    %v1696 = vunpack.c.l.b16 %v1372
    %v1697 = vunpack.c.h.b16 %v1372
    %v1698 = vunpack.c.l.b16 %v1373
    %v1699 = vunpack.c.l.b16 %v1374
    %v1700 = vunpack.c.h.b16 %v1374
    %v1701 = vunpack.c.l.b16 %v1375
    %v1702 = vunpack.c.l.b16 %v1376
    %v1703 = vunpack.c.h.b16 %v1376
    %v1704 = vunpack.c.l.b16 %v1377
    %v1705 = vunpack.c.l.b16 %v1378
    %v1706 = vunpack.c.h.b16 %v1378
    %v1707 = vunpack.c.l.b16 %v1379
    %v1708 = vpack.c.b16 %v1519, %v1516
    %v1709 = vpack.c.b16 %v1520, %v1517
    %v1710 = vpack.c.b16 %v1521, %v1518
    %v1711 = vpack.c.b16 %v1525, %v1522
    %v1712 = vpack.c.b16 %v1526, %v1523
    %v1713 = vpack.c.b16 %v1527, %v1524
    %v1714 = vpack.c.b16 %v1531, %v1528
    %v1715 = vpack.c.b16 %v1532, %v1529
    %v1716 = vpack.c.b16 %v1533, %v1530
    %v1717 = vpack.c.b16 %v1537, %v1534
    %v1718 = vpack.c.b16 %v1538, %v1535
    %v1719 = vpack.c.b16 %v1539, %v1536
    %v1720 = vpack.c.b16 %v1543, %v1540
    %v1721 = vpack.c.b16 %v1544, %v1541
    %v1722 = vpack.c.b16 %v1545, %v1542
    %v1723 = vpack.c.b16 %v1549, %v1546
    %v1724 = vpack.c.b16 %v1550, %v1547
    %v1725 = vpack.c.b16 %v1551, %v1548
    %v1726 = vpack.c.b16 %v1555, %v1552
    %v1727 = vpack.c.b16 %v1556, %v1553
    %v1728 = vpack.c.b16 %v1557, %v1554
    %v1729 = vpack.c.b16 %v1561, %v1558
    %v1730 = vpack.c.b16 %v1562, %v1559
    %v1731 = vpack.c.b16 %v1563, %v1560
    %v1732 = vpack.c.b16 %v1567, %v1564
    %v1733 = vpack.c.b16 %v1568, %v1565
    %v1734 = vpack.c.b16 %v1569, %v1566
    %v1735 = vpack.c.b16 %v1573, %v1570
    %v1736 = vpack.c.b16 %v1574, %v1571
    %v1737 = vpack.c.b16 %v1575, %v1572
    %v1738 = vpack.c.b16 %v1579, %v1576
    %v1739 = vpack.c.b16 %v1580, %v1577
    %v1740 = vpack.c.b16 %v1581, %v1578
    %v1741 = vpack.c.b16 %v1585, %v1582
    %v1742 = vpack.c.b16 %v1586, %v1583
    %v1743 = vpack.c.b16 %v1587, %v1584
    %v1744 = vpack.c.b16 %v1591, %v1588
    %v1745 = vpack.c.b16 %v1592, %v1589
    %v1746 = vpack.c.b16 %v1593, %v1590
    %v1747 = vpack.c.b16 %v1597, %v1594
    %v1748 = vpack.c.b16 %v1598, %v1595
    %v1749 = vpack.c.b16 %v1599, %v1596
    %v1750 = vpack.c.b16 %v1603, %v1600
    %v1751 = vpack.c.b16 %v1604, %v1601
    %v1752 = vpack.c.b16 %v1605, %v1602
    %v1753 = vpack.c.b16 %v1609, %v1606
    %v1754 = vpack.c.b16 %v1610, %v1607
    %v1755 = vpack.c.b16 %v1611, %v1608
    %v1756 = vpack.c.b16 %v1615, %v1612
    %v1757 = vpack.c.b16 %v1616, %v1613
    %v1758 = vpack.c.b16 %v1617, %v1614
    %v1759 = vpack.c.b16 %v1621, %v1618
    %v1760 = vpack.c.b16 %v1622, %v1619
    %v1761 = vpack.c.b16 %v1623, %v1620
    %v1762 = vpack.c.b16 %v1627, %v1624
    %v1763 = vpack.c.b16 %v1628, %v1625
    %v1764 = vpack.c.b16 %v1629, %v1626
    %v1765 = vpack.c.b16 %v1633, %v1630
    %v1766 = vpack.c.b16 %v1634, %v1631
    %v1767 = vpack.c.b16 %v1635, %v1632
    %v1768 = vpack.c.b16 %v1639, %v1636
    %v1769 = vpack.c.b16 %v1640, %v1637
    %v1770 = vpack.c.b16 %v1641, %v1638
    %v1771 = vpack.c.b16 %v1645, %v1642
    %v1772 = vpack.c.b16 %v1646, %v1643
    %v1773 = vpack.c.b16 %v1647, %v1644
    %v1774 = vpack.c.b16 %v1651, %v1648
    %v1775 = vpack.c.b16 %v1652, %v1649
    %v1776 = vpack.c.b16 %v1653, %v1650
    %v1777 = vpack.c.b16 %v1657, %v1654
    %v1778 = vpack.c.b16 %v1658, %v1655
    %v1779 = vpack.c.b16 %v1659, %v1656
    %v1780 = vpack.c.b16 %v1663, %v1660
    %v1781 = vpack.c.b16 %v1664, %v1661
    %v1782 = vpack.c.b16 %v1665, %v1662
    %v1783 = vpack.c.b16 %v1669, %v1666
    %v1784 = vpack.c.b16 %v1670, %v1667
    %v1785 = vpack.c.b16 %v1671, %v1668
    %v1786 = vpack.c.b16 %v1675, %v1672
    %v1787 = vpack.c.b16 %v1676, %v1673
    %v1788 = vpack.c.b16 %v1677, %v1674
    %v1789 = vpack.c.b16 %v1681, %v1678
    %v1790 = vpack.c.b16 %v1682, %v1679
    %v1791 = vpack.c.b16 %v1683, %v1680
    %v1792 = vpack.c.b16 %v1687, %v1684
    %v1793 = vpack.c.b16 %v1688, %v1685
    %v1794 = vpack.c.b16 %v1689, %v1686
    %v1795 = vpack.c.b16 %v1693, %v1690
    %v1796 = vpack.c.b16 %v1694, %v1691
    %v1797 = vpack.c.b16 %v1695, %v1692
    %v1798 = vpack.c.b16 %v1699, %v1696
    %v1799 = vpack.c.b16 %v1700, %v1697
    %v1800 = vpack.c.b16 %v1701, %v1698
    %v1801 = vpack.c.b16 %v1705, %v1702
    %v1802 = vpack.c.b16 %v1706, %v1703
    %v1803 = vpack.c.b16 %v1707, %v1704
    %1900 = vmatpush.bf16.msra.mxu0 %v1729
    %1901 = vmatpush.bf16.msra.mxu0 %v1726
    %1902 = vmatpush.bf16.msra.mxu0 %v1723
    %1903 = vmatpush.bf16.msra.mxu0 %v1720
    %1904 = vmatpush.bf16.msra.mxu0 %v1717
    %1905 = vmatpush.bf16.msra.mxu0 %v1714
    %1906 = vmatpush.bf16.msra.mxu0 %v1711
    %1907 = vmatpush.bf16.msra.mxu0 %v1708
    %1908 = vmatmul.bf16.gmra.mxu0 %v1248
    %v1909 = vpop.f32.mrf.mxu0
    %v1910 = vadd.f32 %v1382, %v1909
    %v1911 = vpop.f32.mrf.mxu0
    %1912 = vdwg.mxu0
    %1913 = vmatpush.bf16.msra.mxu0 %v1753
    %1914 = vmatpush.bf16.msra.mxu0 %v1750
    %1915 = vmatpush.bf16.msra.mxu0 %v1747
    %1916 = vmatpush.bf16.msra.mxu0 %v1744
    %1917 = vmatpush.bf16.msra.mxu0 %v1741
    %1918 = vmatpush.bf16.msra.mxu0 %v1738
    %1919 = vmatpush.bf16.msra.mxu0 %v1735
    %1920 = vmatpush.bf16.msra.mxu0 %v1732
    %1921 = vmatmul.bf16.gmra.mxu0 %v1249
    %v1922 = vpop.f32.mrf.mxu0
    %v1923 = vadd.f32 %v1910, %v1922
    %v1924 = vpop.f32.mrf.mxu0
    %1925 = vdwg.mxu0
    %1926 = vmatpush.bf16.msra.mxu0 %v1777
    %1927 = vmatpush.bf16.msra.mxu0 %v1774
    %1928 = vmatpush.bf16.msra.mxu0 %v1771
    %1929 = vmatpush.bf16.msra.mxu0 %v1768
    %1930 = vmatpush.bf16.msra.mxu0 %v1765
    %1931 = vmatpush.bf16.msra.mxu0 %v1762
    %1932 = vmatpush.bf16.msra.mxu0 %v1759
    %1933 = vmatpush.bf16.msra.mxu0 %v1756
    %1934 = vmatmul.bf16.gmra.mxu0 %v1250
    %v1935 = vpop.f32.mrf.mxu0
    %v1936 = vadd.f32 %v1923, %v1935
    %v1937 = vpop.f32.mrf.mxu0
    %1938 = vdwg.mxu0
    %1939 = vmatpush.bf16.msra.mxu0 %v1801
    %1940 = vmatpush.bf16.msra.mxu0 %v1798
    %1941 = vmatpush.bf16.msra.mxu0 %v1795
    %1942 = vmatpush.bf16.msra.mxu0 %v1792
    %1943 = vmatpush.bf16.msra.mxu0 %v1789
    %1944 = vmatpush.bf16.msra.mxu0 %v1786
    %1945 = vmatpush.bf16.msra.mxu0 %v1783
    %1946 = vmatpush.bf16.msra.mxu0 %v1780
    %1947 = vmatmul.bf16.gmra.mxu0 %v1251
    %v1948 = vpop.f32.mrf.mxu0
    %v1949 = vadd.f32 %v1936, %v1948
    %v1950 = vpop.f32.mrf.mxu0
    %1951 = vdwg.mxu0
    %1952 = vmatpush.bf16.msra.mxu0 %v1730
    %1953 = vmatpush.bf16.msra.mxu0 %v1727
    %1954 = vmatpush.bf16.msra.mxu0 %v1724
    %1955 = vmatpush.bf16.msra.mxu0 %v1721
    %1956 = vmatpush.bf16.msra.mxu0 %v1718
    %1957 = vmatpush.bf16.msra.mxu0 %v1715
    %1958 = vmatpush.bf16.msra.mxu0 %v1712
    %1959 = vmatpush.bf16.msra.mxu0 %v1709
    %1960 = vmatmul.bf16.gmra.mxu0 %v1248
    %v1961 = vpop.f32.mrf.mxu0
    %v1962 = vadd.f32 %v1383, %v1961
    %v1963 = vpop.f32.mrf.mxu0
    %1964 = vdwg.mxu0
    %1965 = vmatpush.bf16.msra.mxu0 %v1754
    %1966 = vmatpush.bf16.msra.mxu0 %v1751
    %1967 = vmatpush.bf16.msra.mxu0 %v1748
    %1968 = vmatpush.bf16.msra.mxu0 %v1745
    %1969 = vmatpush.bf16.msra.mxu0 %v1742
    %1970 = vmatpush.bf16.msra.mxu0 %v1739
    %1971 = vmatpush.bf16.msra.mxu0 %v1736
    %1972 = vmatpush.bf16.msra.mxu0 %v1733
    %1973 = vmatmul.bf16.gmra.mxu0 %v1249
    %v1974 = vpop.f32.mrf.mxu0
    %v1975 = vadd.f32 %v1962, %v1974
    %v1976 = vpop.f32.mrf.mxu0
    %1977 = vdwg.mxu0
    %1978 = vmatpush.bf16.msra.mxu0 %v1778
    %1979 = vmatpush.bf16.msra.mxu0 %v1775
    %1980 = vmatpush.bf16.msra.mxu0 %v1772
    %1981 = vmatpush.bf16.msra.mxu0 %v1769
    %1982 = vmatpush.bf16.msra.mxu0 %v1766
    %1983 = vmatpush.bf16.msra.mxu0 %v1763
    %1984 = vmatpush.bf16.msra.mxu0 %v1760
    %1985 = vmatpush.bf16.msra.mxu0 %v1757
    %1986 = vmatmul.bf16.gmra.mxu0 %v1250
    %v1987 = vpop.f32.mrf.mxu0
    %v1988 = vadd.f32 %v1975, %v1987
    %v1989 = vpop.f32.mrf.mxu0
    %1990 = vdwg.mxu0
    %1991 = vmatpush.bf16.msra.mxu0 %v1802
    %1992 = vmatpush.bf16.msra.mxu0 %v1799
    %1993 = vmatpush.bf16.msra.mxu0 %v1796
    %1994 = vmatpush.bf16.msra.mxu0 %v1793
    %1995 = vmatpush.bf16.msra.mxu0 %v1790
    %1996 = vmatpush.bf16.msra.mxu0 %v1787
    %1997 = vmatpush.bf16.msra.mxu0 %v1784
    %1998 = vmatpush.bf16.msra.mxu0 %v1781
    %1999 = vmatmul.bf16.gmra.mxu0 %v1251
    %v2000 = vpop.f32.mrf.mxu0
    %v2001 = vadd.f32 %v1988, %v2000
    %v2002 = vpop.f32.mrf.mxu0
    %2003 = vdwg.mxu0
    %2004 = vmatpush.bf16.msra.mxu0 %v1731
    %2005 = vmatpush.bf16.msra.mxu0 %v1728
    %2006 = vmatpush.bf16.msra.mxu0 %v1725
    %2007 = vmatpush.bf16.msra.mxu0 %v1722
    %2008 = vmatpush.bf16.msra.mxu0 %v1719
    %2009 = vmatpush.bf16.msra.mxu0 %v1716
    %2010 = vmatpush.bf16.msra.mxu0 %v1713
    %2011 = vmatpush.bf16.msra.mxu0 %v1710
    %2012 = vmatmul.bf16.gmra.mxu0 %v1248
    %v2013 = vpop.f32.mrf.mxu0
    %v2014 = vadd.f32 %v1384, %v2013
    %v2015 = vpop.f32.mrf.mxu0
    %2016 = vdwg.mxu0
    %2017 = vmatpush.bf16.msra.mxu0 %v1755
    %2018 = vmatpush.bf16.msra.mxu0 %v1752
    %2019 = vmatpush.bf16.msra.mxu0 %v1749
    %2020 = vmatpush.bf16.msra.mxu0 %v1746
    %2021 = vmatpush.bf16.msra.mxu0 %v1743
    %2022 = vmatpush.bf16.msra.mxu0 %v1740
    %2023 = vmatpush.bf16.msra.mxu0 %v1737
    %2024 = vmatpush.bf16.msra.mxu0 %v1734
    %2025 = vmatmul.bf16.gmra.mxu0 %v1249
    %v2026 = vpop.f32.mrf.mxu0
    %v2027 = vadd.f32 %v2014, %v2026
    %v2028 = vpop.f32.mrf.mxu0
    %2029 = vdwg.mxu0
    %2030 = vmatpush.bf16.msra.mxu0 %v1779
    %2031 = vmatpush.bf16.msra.mxu0 %v1776
    %2032 = vmatpush.bf16.msra.mxu0 %v1773
    %2033 = vmatpush.bf16.msra.mxu0 %v1770
    %2034 = vmatpush.bf16.msra.mxu0 %v1767
    %2035 = vmatpush.bf16.msra.mxu0 %v1764
    %2036 = vmatpush.bf16.msra.mxu0 %v1761
    %2037 = vmatpush.bf16.msra.mxu0 %v1758
    %2038 = vmatmul.bf16.gmra.mxu0 %v1250
    %v2039 = vpop.f32.mrf.mxu0
    %v2040 = vadd.f32 %v2027, %v2039
    %v2041 = vpop.f32.mrf.mxu0
    %2042 = vdwg.mxu0
    %2043 = vmatpush.bf16.msra.mxu0 %v1803
    %2044 = vmatpush.bf16.msra.mxu0 %v1800
    %2045 = vmatpush.bf16.msra.mxu0 %v1797
    %2046 = vmatpush.bf16.msra.mxu0 %v1794
    %2047 = vmatpush.bf16.msra.mxu0 %v1791
    %2048 = vmatpush.bf16.msra.mxu0 %v1788
    %2049 = vmatpush.bf16.msra.mxu0 %v1785
    %2050 = vmatpush.bf16.msra.mxu0 %v1782
    %2051 = vmatmul.bf16.gmra.mxu0 %v1251
    %v2052 = vpop.f32.mrf.mxu0
    %v2053 = vadd.f32 %v2040, %v2052
    %v2054 = vpop.f32.mrf.mxu0
    %2055 = vdwg.mxu0
    %v2056 = vmax.f32 %v1949, 0.0
    %v2057 = vmax.f32 %v2001, 0.0
    %v2058 = vmax.f32 %v2053, 0.0
    %v2059 = vpack.c.bf16 %v2056, %v2056
    %v2060 = vpack.c.bf16 %v2057, %v2057
    %v2061 = vpack.c.bf16 %v2058, %v2058
    %v2062 = vld [vmem:[#allocation13] sm:$0xff]
    %v2063 = vld [vmem:[#allocation13 + $0x8] sm:$0xf]
    %v2064 = vld [vmem:[#allocation13 + $0xc] sm:$0xff]
    %v2065 = vld [vmem:[#allocation13 + $0x14] sm:$0xf]
    %v2066 = vld [vmem:[#allocation13 + $0x18] sm:$0xff]
    %v2067 = vld [vmem:[#allocation13 + $0x20] sm:$0xf]
    %v2068 = vld [vmem:[#allocation13 + $0x24] sm:$0xff]
    %v2069 = vld [vmem:[#allocation13 + $0x2c] sm:$0xf]
    %v2070 = vld [vmem:[#allocation13 + $0x30] sm:$0xff]
    %v2071 = vld [vmem:[#allocation13 + $0x38] sm:$0xf]
    %v2072 = vld [vmem:[#allocation13 + $0x3c] sm:$0xff]
    %v2073 = vld [vmem:[#allocation13 + $0x44] sm:$0xf]
    %v2074 = vld [vmem:[#allocation13 + $0x48] sm:$0xff]
    %v2075 = vld [vmem:[#allocation13 + $0x50] sm:$0xf]
    %v2076 = vld [vmem:[#allocation13 + $0x54] sm:$0xff]
    %v2077 = vld [vmem:[#allocation13 + $0x5c] sm:$0xf]
    %v2078 = vld [vmem:[#allocation13 + $0x60] sm:$0xff]
    %v2079 = vld [vmem:[#allocation13 + $0x68] sm:$0xf]
    %v2080 = vld [vmem:[#allocation13 + $0x6c] sm:$0xff]
    %v2081 = vld [vmem:[#allocation13 + $0x74] sm:$0xf]
    %v2082 = vld [vmem:[#allocation13 + $0x78] sm:$0xff]
    %v2083 = vld [vmem:[#allocation13 + $0x80] sm:$0xf]
    %v2084 = vld [vmem:[#allocation13 + $0x84] sm:$0xff]
    %v2085 = vld [vmem:[#allocation13 + $0x8c] sm:$0xf]
    %v2086 = vld [vmem:[#allocation13 + $0x90] sm:$0xff]
    %v2087 = vld [vmem:[#allocation13 + $0x98] sm:$0xf]
    %v2088 = vld [vmem:[#allocation13 + $0x9c] sm:$0xff]
    %v2089 = vld [vmem:[#allocation13 + $0xa4] sm:$0xf]
    %v2090 = vld [vmem:[#allocation13 + $0xa8] sm:$0xff]
    %v2091 = vld [vmem:[#allocation13 + $0xb0] sm:$0xf]
    %v2092 = vld [vmem:[#allocation13 + $0xb4] sm:$0xff]
    %v2093 = vld [vmem:[#allocation13 + $0xbc] sm:$0xf]
    %v2094 = vld [vmem:[#allocation13 + $0xc0] sm:$0xff]
    %v2095 = vld [vmem:[#allocation13 + $0xc8] sm:$0xf]
    %v2096 = vld [vmem:[#allocation13 + $0xcc] sm:$0xff]
    %v2097 = vld [vmem:[#allocation13 + $0xd4] sm:$0xf]
    %v2098 = vld [vmem:[#allocation13 + $0xd8] sm:$0xff]
    %v2099 = vld [vmem:[#allocation13 + $0xe0] sm:$0xf]
    %v2100 = vld [vmem:[#allocation13 + $0xe4] sm:$0xff]
    %v2101 = vld [vmem:[#allocation13 + $0xec] sm:$0xf]
    %v2102 = vld [vmem:[#allocation13 + $0xf0] sm:$0xff]
    %v2103 = vld [vmem:[#allocation13 + $0xf8] sm:$0xf]
    %v2104 = vld [vmem:[#allocation13 + $0xfc] sm:$0xff]
    %v2105 = vld [vmem:[#allocation13 + $0x104] sm:$0xf]
    %v2106 = vld [vmem:[#allocation13 + $0x108] sm:$0xff]
    %v2107 = vld [vmem:[#allocation13 + $0x110] sm:$0xf]
    %v2108 = vld [vmem:[#allocation13 + $0x114] sm:$0xff]
    %v2109 = vld [vmem:[#allocation13 + $0x11c] sm:$0xf]
    %v2110 = vld [vmem:[#allocation13 + $0x120] sm:$0xff]
    %v2111 = vld [vmem:[#allocation13 + $0x128] sm:$0xf]
    %v2112 = vld [vmem:[#allocation13 + $0x12c] sm:$0xff]
    %v2113 = vld [vmem:[#allocation13 + $0x134] sm:$0xf]
    %v2114 = vld [vmem:[#allocation13 + $0x138] sm:$0xff]
    %v2115 = vld [vmem:[#allocation13 + $0x140] sm:$0xf]
    %v2116 = vld [vmem:[#allocation13 + $0x144] sm:$0xff]
    %v2117 = vld [vmem:[#allocation13 + $0x14c] sm:$0xf]
    %v2118 = vld [vmem:[#allocation13 + $0x150] sm:$0xff]
    %v2119 = vld [vmem:[#allocation13 + $0x158] sm:$0xf]
    %v2120 = vld [vmem:[#allocation13 + $0x15c] sm:$0xff]
    %v2121 = vld [vmem:[#allocation13 + $0x164] sm:$0xf]
    %v2122 = vld [vmem:[#allocation13 + $0x168] sm:$0xff]
    %v2123 = vld [vmem:[#allocation13 + $0x170] sm:$0xf]
    %v2124 = vld [vmem:[#allocation13 + $0x174] sm:$0xff]
    %v2125 = vld [vmem:[#allocation13 + $0x17c] sm:$0xf]
    %v2126 = vld [vmem:[#allocation13 + $0x180] sm:$0xff]
    %v2127 = vld [vmem:[#allocation13 + $0x188] sm:$0xf]
    %v2128 = vld [vmem:[#allocation13 + $0x18c] sm:$0xff]
    %v2129 = vld [vmem:[#allocation13 + $0x194] sm:$0xf]
    %v2130 = vld [vmem:[#allocation13 + $0x198] sm:$0xff]
    %v2131 = vld [vmem:[#allocation13 + $0x1a0] sm:$0xf]
    %v2132 = vld [vmem:[#allocation13 + $0x1a4] sm:$0xff]
    %v2133 = vld [vmem:[#allocation13 + $0x1ac] sm:$0xf]
    %v2134 = vld [vmem:[#allocation13 + $0x1b0] sm:$0xff]
    %v2135 = vld [vmem:[#allocation13 + $0x1b8] sm:$0xf]
    %v2136 = vld [vmem:[#allocation13 + $0x1bc] sm:$0xff]
    %v2137 = vld [vmem:[#allocation13 + $0x1c4] sm:$0xf]
    %v2138 = vld [vmem:[#allocation13 + $0x1c8] sm:$0xff]
    %v2139 = vld [vmem:[#allocation13 + $0x1d0] sm:$0xf]
    %v2140 = vld [vmem:[#allocation13 + $0x1d4] sm:$0xff]
    %v2141 = vld [vmem:[#allocation13 + $0x1dc] sm:$0xf]
    %v2142 = vld [vmem:[#allocation13 + $0x1e0] sm:$0xff]
    %v2143 = vld [vmem:[#allocation13 + $0x1e8] sm:$0xf]
    %v2144 = vld [vmem:[#allocation13 + $0x1ec] sm:$0xff]
    %v2145 = vld [vmem:[#allocation13 + $0x1f4] sm:$0xf]
    %v2146 = vld [vmem:[#allocation13 + $0x1f8] sm:$0xff]
    %v2147 = vld [vmem:[#allocation13 + $0x200] sm:$0xf]
    %v2148 = vld [vmem:[#allocation13 + $0x204] sm:$0xff]
    %v2149 = vld [vmem:[#allocation13 + $0x20c] sm:$0xf]
    %v2150 = vld [vmem:[#allocation13 + $0x210] sm:$0xff]
    %v2151 = vld [vmem:[#allocation13 + $0x218] sm:$0xf]
    %v2152 = vld [vmem:[#allocation13 + $0x21c] sm:$0xff]
    %v2153 = vld [vmem:[#allocation13 + $0x224] sm:$0xf]
    %v2154 = vld [vmem:[#allocation13 + $0x228] sm:$0xff]
    %v2155 = vld [vmem:[#allocation13 + $0x230] sm:$0xf]
    %v2156 = vld [vmem:[#allocation13 + $0x234] sm:$0xff]
    %v2157 = vld [vmem:[#allocation13 + $0x23c] sm:$0xf]
    %v2158 = vld [vmem:[%s8] sm:$0x7]
    %v2160 = vperm.slane %v2158, 0
    %v2161 = vperm.slane %v2158, 1
    %v2162 = vperm.slane %v2158, 2
    %v2262 = vunpack.c.l.b16 %v2062
    %v2263 = vunpack.c.h.b16 %v2062
    %v2264 = vunpack.c.l.b16 %v2063
    %v2265 = vunpack.c.l.b16 %v2064
    %v2266 = vunpack.c.h.b16 %v2064
    %v2267 = vunpack.c.l.b16 %v2065
    %v2268 = vunpack.c.l.b16 %v2066
    %v2269 = vunpack.c.h.b16 %v2066
    %v2270 = vunpack.c.l.b16 %v2067
    %v2271 = vunpack.c.l.b16 %v2068
    %v2272 = vunpack.c.h.b16 %v2068
    %v2273 = vunpack.c.l.b16 %v2069
    %v2274 = vunpack.c.l.b16 %v2070
    %v2275 = vunpack.c.h.b16 %v2070
    %v2276 = vunpack.c.l.b16 %v2071
    %v2277 = vunpack.c.l.b16 %v2072
    %v2278 = vunpack.c.h.b16 %v2072
    %v2279 = vunpack.c.l.b16 %v2073
    %v2280 = vunpack.c.l.b16 %v2074
    %v2281 = vunpack.c.h.b16 %v2074
    %v2282 = vunpack.c.l.b16 %v2075
    %v2283 = vunpack.c.l.b16 %v2076
    %v2284 = vunpack.c.h.b16 %v2076
    %v2285 = vunpack.c.l.b16 %v2077
    %v2286 = vunpack.c.l.b16 %v2078
    %v2287 = vunpack.c.h.b16 %v2078
    %v2288 = vunpack.c.l.b16 %v2079
    %v2289 = vunpack.c.l.b16 %v2080
    %v2290 = vunpack.c.h.b16 %v2080
    %v2291 = vunpack.c.l.b16 %v2081
    %v2292 = vunpack.c.l.b16 %v2082
    %v2293 = vunpack.c.h.b16 %v2082
    %v2294 = vunpack.c.l.b16 %v2083
    %v2295 = vunpack.c.l.b16 %v2084
    %v2296 = vunpack.c.h.b16 %v2084
    %v2297 = vunpack.c.l.b16 %v2085
    %v2298 = vunpack.c.l.b16 %v2086
    %v2299 = vunpack.c.h.b16 %v2086
    %v2300 = vunpack.c.l.b16 %v2087
    %v2301 = vunpack.c.l.b16 %v2088
    %v2302 = vunpack.c.h.b16 %v2088
    %v2303 = vunpack.c.l.b16 %v2089
    %v2304 = vunpack.c.l.b16 %v2090
    %v2305 = vunpack.c.h.b16 %v2090
    %v2306 = vunpack.c.l.b16 %v2091
    %v2307 = vunpack.c.l.b16 %v2092
    %v2308 = vunpack.c.h.b16 %v2092
    %v2309 = vunpack.c.l.b16 %v2093
    %v2310 = vunpack.c.l.b16 %v2094
    %v2311 = vunpack.c.h.b16 %v2094
    %v2312 = vunpack.c.l.b16 %v2095
    %v2313 = vunpack.c.l.b16 %v2096
    %v2314 = vunpack.c.h.b16 %v2096
    %v2315 = vunpack.c.l.b16 %v2097
    %v2316 = vunpack.c.l.b16 %v2098
    %v2317 = vunpack.c.h.b16 %v2098
    %v2318 = vunpack.c.l.b16 %v2099
    %v2319 = vunpack.c.l.b16 %v2100
    %v2320 = vunpack.c.h.b16 %v2100
    %v2321 = vunpack.c.l.b16 %v2101
    %v2322 = vunpack.c.l.b16 %v2102
    %v2323 = vunpack.c.h.b16 %v2102
    %v2324 = vunpack.c.l.b16 %v2103
    %v2325 = vunpack.c.l.b16 %v2104
    %v2326 = vunpack.c.h.b16 %v2104
    %v2327 = vunpack.c.l.b16 %v2105
    %v2328 = vunpack.c.l.b16 %v2106
    %v2329 = vunpack.c.h.b16 %v2106
    %v2330 = vunpack.c.l.b16 %v2107
    %v2331 = vunpack.c.l.b16 %v2108
    %v2332 = vunpack.c.h.b16 %v2108
    %v2333 = vunpack.c.l.b16 %v2109
    %v2334 = vunpack.c.l.b16 %v2110
    %v2335 = vunpack.c.h.b16 %v2110
    %v2336 = vunpack.c.l.b16 %v2111
    %v2337 = vunpack.c.l.b16 %v2112
    %v2338 = vunpack.c.h.b16 %v2112
    %v2339 = vunpack.c.l.b16 %v2113
    %v2340 = vunpack.c.l.b16 %v2114
    %v2341 = vunpack.c.h.b16 %v2114
    %v2342 = vunpack.c.l.b16 %v2115
    %v2343 = vunpack.c.l.b16 %v2116
    %v2344 = vunpack.c.h.b16 %v2116
    %v2345 = vunpack.c.l.b16 %v2117
    %v2346 = vunpack.c.l.b16 %v2118
    %v2347 = vunpack.c.h.b16 %v2118
    %v2348 = vunpack.c.l.b16 %v2119
    %v2349 = vunpack.c.l.b16 %v2120
    %v2350 = vunpack.c.h.b16 %v2120
    %v2351 = vunpack.c.l.b16 %v2121
    %v2352 = vunpack.c.l.b16 %v2122
    %v2353 = vunpack.c.h.b16 %v2122
    %v2354 = vunpack.c.l.b16 %v2123
    %v2355 = vunpack.c.l.b16 %v2124
    %v2356 = vunpack.c.h.b16 %v2124
    %v2357 = vunpack.c.l.b16 %v2125
    %v2358 = vunpack.c.l.b16 %v2126
    %v2359 = vunpack.c.h.b16 %v2126
    %v2360 = vunpack.c.l.b16 %v2127
    %v2361 = vunpack.c.l.b16 %v2128
    %v2362 = vunpack.c.h.b16 %v2128
    %v2363 = vunpack.c.l.b16 %v2129
    %v2364 = vunpack.c.l.b16 %v2130
    %v2365 = vunpack.c.h.b16 %v2130
    %v2366 = vunpack.c.l.b16 %v2131
    %v2367 = vunpack.c.l.b16 %v2132
    %v2368 = vunpack.c.h.b16 %v2132
    %v2369 = vunpack.c.l.b16 %v2133
    %v2370 = vunpack.c.l.b16 %v2134
    %v2371 = vunpack.c.h.b16 %v2134
    %v2372 = vunpack.c.l.b16 %v2135
    %v2373 = vunpack.c.l.b16 %v2136
    %v2374 = vunpack.c.h.b16 %v2136
    %v2375 = vunpack.c.l.b16 %v2137
    %v2376 = vunpack.c.l.b16 %v2138
    %v2377 = vunpack.c.h.b16 %v2138
    %v2378 = vunpack.c.l.b16 %v2139
    %v2379 = vunpack.c.l.b16 %v2140
    %v2380 = vunpack.c.h.b16 %v2140
    %v2381 = vunpack.c.l.b16 %v2141
    %v2382 = vunpack.c.l.b16 %v2142
    %v2383 = vunpack.c.h.b16 %v2142
    %v2384 = vunpack.c.l.b16 %v2143
    %v2385 = vunpack.c.l.b16 %v2144
    %v2386 = vunpack.c.h.b16 %v2144
    %v2387 = vunpack.c.l.b16 %v2145
    %v2388 = vunpack.c.l.b16 %v2146
    %v2389 = vunpack.c.h.b16 %v2146
    %v2390 = vunpack.c.l.b16 %v2147
    %v2391 = vunpack.c.l.b16 %v2148
    %v2392 = vunpack.c.h.b16 %v2148
    %v2393 = vunpack.c.l.b16 %v2149
    %v2394 = vunpack.c.l.b16 %v2150
    %v2395 = vunpack.c.h.b16 %v2150
    %v2396 = vunpack.c.l.b16 %v2151
    %v2397 = vunpack.c.l.b16 %v2152
    %v2398 = vunpack.c.h.b16 %v2152
    %v2399 = vunpack.c.l.b16 %v2153
    %v2400 = vunpack.c.l.b16 %v2154
    %v2401 = vunpack.c.h.b16 %v2154
    %v2402 = vunpack.c.l.b16 %v2155
    %v2403 = vunpack.c.l.b16 %v2156
    %v2404 = vunpack.c.h.b16 %v2156
    %v2405 = vunpack.c.l.b16 %v2157
    %v2406 = vpack.c.b16 %v2265, %v2262
    %v2407 = vpack.c.b16 %v2266, %v2263
    %v2408 = vpack.c.b16 %v2267, %v2264
    %v2409 = vpack.c.b16 %v2271, %v2268
    %v2410 = vpack.c.b16 %v2272, %v2269
    %v2411 = vpack.c.b16 %v2273, %v2270
    %v2412 = vpack.c.b16 %v2277, %v2274
    %v2413 = vpack.c.b16 %v2278, %v2275
    %v2414 = vpack.c.b16 %v2279, %v2276
    %v2415 = vpack.c.b16 %v2283, %v2280
    %v2416 = vpack.c.b16 %v2284, %v2281
    %v2417 = vpack.c.b16 %v2285, %v2282
    %v2418 = vpack.c.b16 %v2289, %v2286
    %v2419 = vpack.c.b16 %v2290, %v2287
    %v2420 = vpack.c.b16 %v2291, %v2288
    %v2421 = vpack.c.b16 %v2295, %v2292
    %v2422 = vpack.c.b16 %v2296, %v2293
    %v2423 = vpack.c.b16 %v2297, %v2294
    %v2424 = vpack.c.b16 %v2301, %v2298
    %v2425 = vpack.c.b16 %v2302, %v2299
    %v2426 = vpack.c.b16 %v2303, %v2300
    %v2427 = vpack.c.b16 %v2307, %v2304
    %v2428 = vpack.c.b16 %v2308, %v2305
    %v2429 = vpack.c.b16 %v2309, %v2306
    %v2430 = vpack.c.b16 %v2313, %v2310
    %v2431 = vpack.c.b16 %v2314, %v2311
    %v2432 = vpack.c.b16 %v2315, %v2312
    %v2433 = vpack.c.b16 %v2319, %v2316
    %v2434 = vpack.c.b16 %v2320, %v2317
    %v2435 = vpack.c.b16 %v2321, %v2318
    %v2436 = vpack.c.b16 %v2325, %v2322
    %v2437 = vpack.c.b16 %v2326, %v2323
    %v2438 = vpack.c.b16 %v2327, %v2324
    %v2439 = vpack.c.b16 %v2331, %v2328
    %v2440 = vpack.c.b16 %v2332, %v2329
    %v2441 = vpack.c.b16 %v2333, %v2330
    %v2442 = vpack.c.b16 %v2337, %v2334
    %v2443 = vpack.c.b16 %v2338, %v2335
    %v2444 = vpack.c.b16 %v2339, %v2336
    %v2445 = vpack.c.b16 %v2343, %v2340
    %v2446 = vpack.c.b16 %v2344, %v2341
    %v2447 = vpack.c.b16 %v2345, %v2342
    %v2448 = vpack.c.b16 %v2349, %v2346
    %v2449 = vpack.c.b16 %v2350, %v2347
    %v2450 = vpack.c.b16 %v2351, %v2348
    %v2451 = vpack.c.b16 %v2355, %v2352
    %v2452 = vpack.c.b16 %v2356, %v2353
    %v2453 = vpack.c.b16 %v2357, %v2354
    %v2454 = vpack.c.b16 %v2361, %v2358
    %v2455 = vpack.c.b16 %v2362, %v2359
    %v2456 = vpack.c.b16 %v2363, %v2360
    %v2457 = vpack.c.b16 %v2367, %v2364
    %v2458 = vpack.c.b16 %v2368, %v2365
    %v2459 = vpack.c.b16 %v2369, %v2366
    %v2460 = vpack.c.b16 %v2373, %v2370
    %v2461 = vpack.c.b16 %v2374, %v2371
    %v2462 = vpack.c.b16 %v2375, %v2372
    %v2463 = vpack.c.b16 %v2379, %v2376
    %v2464 = vpack.c.b16 %v2380, %v2377
    %v2465 = vpack.c.b16 %v2381, %v2378
    %v2466 = vpack.c.b16 %v2385, %v2382
    %v2467 = vpack.c.b16 %v2386, %v2383
    %v2468 = vpack.c.b16 %v2387, %v2384
    %v2469 = vpack.c.b16 %v2391, %v2388
    %v2470 = vpack.c.b16 %v2392, %v2389
    %v2471 = vpack.c.b16 %v2393, %v2390
    %v2472 = vpack.c.b16 %v2397, %v2394
    %v2473 = vpack.c.b16 %v2398, %v2395
    %v2474 = vpack.c.b16 %v2399, %v2396
    %v2475 = vpack.c.b16 %v2403, %v2400
    %v2476 = vpack.c.b16 %v2404, %v2401
    %v2477 = vpack.c.b16 %v2405, %v2402
    %2550 = vmatpush.bf16.msra.mxu0 %v2427
    %2551 = vmatpush.bf16.msra.mxu0 %v2424
    %2552 = vmatpush.bf16.msra.mxu0 %v2421
    %2553 = vmatpush.bf16.msra.mxu0 %v2418
    %2554 = vmatpush.bf16.msra.mxu0 %v2415
    %2555 = vmatpush.bf16.msra.mxu0 %v2412
    %2556 = vmatpush.bf16.msra.mxu0 %v2409
    %2557 = vmatpush.bf16.msra.mxu0 %v2406
    %2558 = vmatmul.bf16.gmra.mxu0 %v2059
    %v2559 = vpop.f32.mrf.mxu0
    %v2560 = vadd.f32 %v2160, %v2559
    %v2561 = vpop.f32.mrf.mxu0
    %2562 = vdwg.mxu0
    %2563 = vmatpush.bf16.msra.mxu0 %v2451
    %2564 = vmatpush.bf16.msra.mxu0 %v2448
    %2565 = vmatpush.bf16.msra.mxu0 %v2445
    %2566 = vmatpush.bf16.msra.mxu0 %v2442
    %2567 = vmatpush.bf16.msra.mxu0 %v2439
    %2568 = vmatpush.bf16.msra.mxu0 %v2436
    %2569 = vmatpush.bf16.msra.mxu0 %v2433
    %2570 = vmatpush.bf16.msra.mxu0 %v2430
    %2571 = vmatmul.bf16.gmra.mxu0 %v2060
    %v2572 = vpop.f32.mrf.mxu0
    %v2573 = vadd.f32 %v2560, %v2572
    %v2574 = vpop.f32.mrf.mxu0
    %2575 = vdwg.mxu0
    %2576 = vmatpush.bf16.msra.mxu0 %v2475
    %2577 = vmatpush.bf16.msra.mxu0 %v2472
    %2578 = vmatpush.bf16.msra.mxu0 %v2469
    %2579 = vmatpush.bf16.msra.mxu0 %v2466
    %2580 = vmatpush.bf16.msra.mxu0 %v2463
    %2581 = vmatpush.bf16.msra.mxu0 %v2460
    %2582 = vmatpush.bf16.msra.mxu0 %v2457
    %2583 = vmatpush.bf16.msra.mxu0 %v2454
    %2584 = vmatmul.bf16.gmra.mxu0 %v2061
    %v2585 = vpop.f32.mrf.mxu0
    %v2586 = vadd.f32 %v2573, %v2585
    %v2587 = vpop.f32.mrf.mxu0
    %2588 = vdwg.mxu0
    %2589 = vmatpush.bf16.msra.mxu0 %v2428
    %2590 = vmatpush.bf16.msra.mxu0 %v2425
    %2591 = vmatpush.bf16.msra.mxu0 %v2422
    %2592 = vmatpush.bf16.msra.mxu0 %v2419
    %2593 = vmatpush.bf16.msra.mxu0 %v2416
    %2594 = vmatpush.bf16.msra.mxu0 %v2413
    %2595 = vmatpush.bf16.msra.mxu0 %v2410
    %2596 = vmatpush.bf16.msra.mxu0 %v2407
    %2597 = vmatmul.bf16.gmra.mxu0 %v2059
    %v2598 = vpop.f32.mrf.mxu0
    %v2599 = vadd.f32 %v2161, %v2598
    %v2600 = vpop.f32.mrf.mxu0
    %2601 = vdwg.mxu0
    %2602 = vmatpush.bf16.msra.mxu0 %v2452
    %2603 = vmatpush.bf16.msra.mxu0 %v2449
    %2604 = vmatpush.bf16.msra.mxu0 %v2446
    %2605 = vmatpush.bf16.msra.mxu0 %v2443
    %2606 = vmatpush.bf16.msra.mxu0 %v2440
    %2607 = vmatpush.bf16.msra.mxu0 %v2437
    %2608 = vmatpush.bf16.msra.mxu0 %v2434
    %2609 = vmatpush.bf16.msra.mxu0 %v2431
    %2610 = vmatmul.bf16.gmra.mxu0 %v2060
    %v2611 = vpop.f32.mrf.mxu0
    %v2612 = vadd.f32 %v2599, %v2611
    %v2613 = vpop.f32.mrf.mxu0
    %2614 = vdwg.mxu0
    %2615 = vmatpush.bf16.msra.mxu0 %v2476
    %2616 = vmatpush.bf16.msra.mxu0 %v2473
    %2617 = vmatpush.bf16.msra.mxu0 %v2470
    %2618 = vmatpush.bf16.msra.mxu0 %v2467
    %2619 = vmatpush.bf16.msra.mxu0 %v2464
    %2620 = vmatpush.bf16.msra.mxu0 %v2461
    %2621 = vmatpush.bf16.msra.mxu0 %v2458
    %2622 = vmatpush.bf16.msra.mxu0 %v2455
    %2623 = vmatmul.bf16.gmra.mxu0 %v2061
    %v2624 = vpop.f32.mrf.mxu0
    %v2625 = vadd.f32 %v2612, %v2624
    %v2626 = vpop.f32.mrf.mxu0
    %2627 = vdwg.mxu0
    %2628 = vmatpush.bf16.msra.mxu0 %v2429
    %2629 = vmatpush.bf16.msra.mxu0 %v2426
    %2630 = vmatpush.bf16.msra.mxu0 %v2423
    %2631 = vmatpush.bf16.msra.mxu0 %v2420
    %2632 = vmatpush.bf16.msra.mxu0 %v2417
    %2633 = vmatpush.bf16.msra.mxu0 %v2414
    %2634 = vmatpush.bf16.msra.mxu0 %v2411
    %2635 = vmatpush.bf16.msra.mxu0 %v2408
    %2636 = vmatmul.bf16.gmra.mxu0 %v2059
    %v2637 = vpop.f32.mrf.mxu0
    %v2638 = vadd.f32 %v2162, %v2637
    %v2639 = vpop.f32.mrf.mxu0
    %2640 = vdwg.mxu0
    %2641 = vmatpush.bf16.msra.mxu0 %v2453
    %2642 = vmatpush.bf16.msra.mxu0 %v2450
    %2643 = vmatpush.bf16.msra.mxu0 %v2447
    %2644 = vmatpush.bf16.msra.mxu0 %v2444
    %2645 = vmatpush.bf16.msra.mxu0 %v2441
    %2646 = vmatpush.bf16.msra.mxu0 %v2438
    %2647 = vmatpush.bf16.msra.mxu0 %v2435
    %2648 = vmatpush.bf16.msra.mxu0 %v2432
    %2649 = vmatmul.bf16.gmra.mxu0 %v2060
    %v2650 = vpop.f32.mrf.mxu0
    %v2651 = vadd.f32 %v2638, %v2650
    %v2652 = vpop.f32.mrf.mxu0
    %2653 = vdwg.mxu0
    %2654 = vmatpush.bf16.msra.mxu0 %v2477
    %2655 = vmatpush.bf16.msra.mxu0 %v2474
    %2656 = vmatpush.bf16.msra.mxu0 %v2471
    %2657 = vmatpush.bf16.msra.mxu0 %v2468
    %2658 = vmatpush.bf16.msra.mxu0 %v2465
    %2659 = vmatpush.bf16.msra.mxu0 %v2462
    %2660 = vmatpush.bf16.msra.mxu0 %v2459
    %2661 = vmatpush.bf16.msra.mxu0 %v2456
    %2662 = vmatmul.bf16.gmra.mxu0 %v2061
    %v2663 = vpop.f32.mrf.mxu0
    %v2664 = vadd.f32 %v2651, %v2663
    %v2665 = vpop.f32.mrf.mxu0
    %2666 = vdwg.mxu0
    %v2667 = vmax.f32 %v2586, 0.0
    %v2668 = vmax.f32 %v2625, 0.0
    %v2669 = vmax.f32 %v2664, 0.0
    %v2670 = vpack.c.bf16 %v2667, %v2667
    %v2671 = vpack.c.bf16 %v2668, %v2668
    %v2672 = vpack.c.bf16 %v2669, %v2669
    %v2673 = vld [vmem:[#allocation14] sm:$0xf]
    %v2674 = vld [vmem:[#allocation14 + $0x4] sm:$0xf]
    %v2675 = vld [vmem:[#allocation14 + $0x8] sm:$0xf]
    %v2676 = vld [vmem:[#allocation14 + $0xc] sm:$0xf]
    %v2677 = vld [vmem:[#allocation14 + $0x10] sm:$0xf]
    %v2678 = vld [vmem:[#allocation14 + $0x14] sm:$0xf]
    %v2679 = vld [vmem:[#allocation14 + $0x18] sm:$0xf]
    %v2680 = vld [vmem:[#allocation14 + $0x1c] sm:$0xf]
    %v2681 = vld [vmem:[#allocation14 + $0x20] sm:$0xf]
    %v2682 = vld [vmem:[#allocation14 + $0x24] sm:$0xf]
    %v2683 = vld [vmem:[#allocation14 + $0x28] sm:$0xf]
    %v2684 = vld [vmem:[#allocation14 + $0x2c] sm:$0xf]
    %v2685 = vld [vmem:[#allocation14 + $0x30] sm:$0xf]
    %v2686 = vld [vmem:[#allocation14 + $0x34] sm:$0xf]
    %v2687 = vld [vmem:[#allocation14 + $0x38] sm:$0xf]
    %v2688 = vld [vmem:[#allocation14 + $0x3c] sm:$0xf]
    %v2689 = vld [vmem:[#allocation14 + $0x40] sm:$0xf]
    %v2690 = vld [vmem:[#allocation14 + $0x44] sm:$0xf]
    %v2691 = vld [vmem:[#allocation14 + $0x48] sm:$0xf]
    %v2692 = vld [vmem:[#allocation14 + $0x4c] sm:$0xf]
    %v2693 = vld [vmem:[#allocation14 + $0x50] sm:$0xf]
    %v2694 = vld [vmem:[#allocation14 + $0x54] sm:$0xf]
    %v2695 = vld [vmem:[#allocation14 + $0x58] sm:$0xf]
    %v2696 = vld [vmem:[#allocation14 + $0x5c] sm:$0xf]
    %v2697 = vld [vmem:[#allocation14 + $0x60] sm:$0xf]
    %v2698 = vld [vmem:[#allocation14 + $0x64] sm:$0xf]
    %v2699 = vld [vmem:[#allocation14 + $0x68] sm:$0xf]
    %v2700 = vld [vmem:[#allocation14 + $0x6c] sm:$0xf]
    %v2701 = vld [vmem:[#allocation14 + $0x70] sm:$0xf]
    %v2702 = vld [vmem:[#allocation14 + $0x74] sm:$0xf]
    %v2703 = vld [vmem:[#allocation14 + $0x78] sm:$0xf]
    %v2704 = vld [vmem:[#allocation14 + $0x7c] sm:$0xf]
    %v2705 = vld [vmem:[#allocation14 + $0x80] sm:$0xf]
    %v2706 = vld [vmem:[#allocation14 + $0x84] sm:$0xf]
    %v2707 = vld [vmem:[#allocation14 + $0x88] sm:$0xf]
    %v2708 = vld [vmem:[#allocation14 + $0x8c] sm:$0xf]
    %v2709 = vld [vmem:[#allocation14 + $0x90] sm:$0xf]
    %v2710 = vld [vmem:[#allocation14 + $0x94] sm:$0xf]
    %v2711 = vld [vmem:[#allocation14 + $0x98] sm:$0xf]
    %v2712 = vld [vmem:[#allocation14 + $0x9c] sm:$0xf]
    %v2713 = vld [vmem:[#allocation14 + $0xa0] sm:$0xf]
    %v2714 = vld [vmem:[#allocation14 + $0xa4] sm:$0xf]
    %v2715 = vld [vmem:[#allocation14 + $0xa8] sm:$0xf]
    %v2716 = vld [vmem:[#allocation14 + $0xac] sm:$0xf]
    %v2717 = vld [vmem:[#allocation14 + $0xb0] sm:$0xf]
    %v2718 = vld [vmem:[#allocation14 + $0xb4] sm:$0xf]
    %v2719 = vld [vmem:[#allocation14 + $0xb8] sm:$0xf]
    %v2720 = vld [vmem:[#allocation14 + $0xbc] sm:$0xf]
    %v2721 = vld [vmem:[%s10] sm:$0x1]
    %v2723 = vperm.slane %v2721, 0
    %v2773 = vunpack.c.l.b16 %v2673
    %v2774 = vunpack.c.l.b16 %v2674
    %v2775 = vunpack.c.l.b16 %v2675
    %v2776 = vunpack.c.l.b16 %v2676
    %v2777 = vunpack.c.l.b16 %v2677
    %v2778 = vunpack.c.l.b16 %v2678
    %v2779 = vunpack.c.l.b16 %v2679
    %v2780 = vunpack.c.l.b16 %v2680
    %v2781 = vunpack.c.l.b16 %v2681
    %v2782 = vunpack.c.l.b16 %v2682
    %v2783 = vunpack.c.l.b16 %v2683
    %v2784 = vunpack.c.l.b16 %v2684
    %v2785 = vunpack.c.l.b16 %v2685
    %v2786 = vunpack.c.l.b16 %v2686
    %v2787 = vunpack.c.l.b16 %v2687
    %v2788 = vunpack.c.l.b16 %v2688
    %v2789 = vunpack.c.l.b16 %v2689
    %v2790 = vunpack.c.l.b16 %v2690
    %v2791 = vunpack.c.l.b16 %v2691
    %v2792 = vunpack.c.l.b16 %v2692
    %v2793 = vunpack.c.l.b16 %v2693
    %v2794 = vunpack.c.l.b16 %v2694
    %v2795 = vunpack.c.l.b16 %v2695
    %v2796 = vunpack.c.l.b16 %v2696
    %v2797 = vunpack.c.l.b16 %v2697
    %v2798 = vunpack.c.l.b16 %v2698
    %v2799 = vunpack.c.l.b16 %v2699
    %v2800 = vunpack.c.l.b16 %v2700
    %v2801 = vunpack.c.l.b16 %v2701
    %v2802 = vunpack.c.l.b16 %v2702
    %v2803 = vunpack.c.l.b16 %v2703
    %v2804 = vunpack.c.l.b16 %v2704
    %v2805 = vunpack.c.l.b16 %v2705
    %v2806 = vunpack.c.l.b16 %v2706
    %v2807 = vunpack.c.l.b16 %v2707
    %v2808 = vunpack.c.l.b16 %v2708
    %v2809 = vunpack.c.l.b16 %v2709
    %v2810 = vunpack.c.l.b16 %v2710
    %v2811 = vunpack.c.l.b16 %v2711
    %v2812 = vunpack.c.l.b16 %v2712
    %v2813 = vunpack.c.l.b16 %v2713
    %v2814 = vunpack.c.l.b16 %v2714
    %v2815 = vunpack.c.l.b16 %v2715
    %v2816 = vunpack.c.l.b16 %v2716
    %v2817 = vunpack.c.l.b16 %v2717
    %v2818 = vunpack.c.l.b16 %v2718
    %v2819 = vunpack.c.l.b16 %v2719
    %v2820 = vunpack.c.l.b16 %v2720
    %v2821 = vpack.c.b16 %v2774, %v2773
    %v2822 = vpack.c.b16 %v2776, %v2775
    %v2823 = vpack.c.b16 %v2778, %v2777
    %v2824 = vpack.c.b16 %v2780, %v2779
    %v2825 = vpack.c.b16 %v2782, %v2781
    %v2826 = vpack.c.b16 %v2784, %v2783
    %v2827 = vpack.c.b16 %v2786, %v2785
    %v2828 = vpack.c.b16 %v2788, %v2787
    %v2829 = vpack.c.b16 %v2790, %v2789
    %v2830 = vpack.c.b16 %v2792, %v2791
    %v2831 = vpack.c.b16 %v2794, %v2793
    %v2832 = vpack.c.b16 %v2796, %v2795
    %v2833 = vpack.c.b16 %v2798, %v2797
    %v2834 = vpack.c.b16 %v2800, %v2799
    %v2835 = vpack.c.b16 %v2802, %v2801
    %v2836 = vpack.c.b16 %v2804, %v2803
    %v2837 = vpack.c.b16 %v2806, %v2805
    %v2838 = vpack.c.b16 %v2808, %v2807
    %v2839 = vpack.c.b16 %v2810, %v2809
    %v2840 = vpack.c.b16 %v2812, %v2811
    %v2841 = vpack.c.b16 %v2814, %v2813
    %v2842 = vpack.c.b16 %v2816, %v2815
    %v2843 = vpack.c.b16 %v2818, %v2817
    %v2844 = vpack.c.b16 %v2820, %v2819
    %2869 = vmatpush.bf16.msra.mxu0 %v2828
    %2870 = vmatpush.bf16.msra.mxu0 %v2827
    %2871 = vmatpush.bf16.msra.mxu0 %v2826
    %2872 = vmatpush.bf16.msra.mxu0 %v2825
    %2873 = vmatpush.bf16.msra.mxu0 %v2824
    %2874 = vmatpush.bf16.msra.mxu0 %v2823
    %2875 = vmatpush.bf16.msra.mxu0 %v2822
    %2876 = vmatpush.bf16.msra.mxu0 %v2821
    %2877 = vmatmul.bf16.gmra.mxu0 %v2670
    %v2878 = vpop.f32.mrf.mxu0
    %v2879 = vadd.f32 %v2723, %v2878
    %v2880 = vpop.f32.mrf.mxu0
    %2881 = vdwg.mxu0
    %2882 = vmatpush.bf16.msra.mxu0 %v2836
    %2883 = vmatpush.bf16.msra.mxu0 %v2835
    %2884 = vmatpush.bf16.msra.mxu0 %v2834
    %2885 = vmatpush.bf16.msra.mxu0 %v2833
    %2886 = vmatpush.bf16.msra.mxu0 %v2832
    %2887 = vmatpush.bf16.msra.mxu0 %v2831
    %2888 = vmatpush.bf16.msra.mxu0 %v2830
    %2889 = vmatpush.bf16.msra.mxu0 %v2829
    %2890 = vmatmul.bf16.gmra.mxu0 %v2671
    %v2891 = vpop.f32.mrf.mxu0
    %v2892 = vadd.f32 %v2879, %v2891
    %v2893 = vpop.f32.mrf.mxu0
    %2894 = vdwg.mxu0
    %2895 = vmatpush.bf16.msra.mxu0 %v2844
    %2896 = vmatpush.bf16.msra.mxu0 %v2843
    %2897 = vmatpush.bf16.msra.mxu0 %v2842
    %2898 = vmatpush.bf16.msra.mxu0 %v2841
    %2899 = vmatpush.bf16.msra.mxu0 %v2840
    %2900 = vmatpush.bf16.msra.mxu0 %v2839
    %2901 = vmatpush.bf16.msra.mxu0 %v2838
    %2902 = vmatpush.bf16.msra.mxu0 %v2837
    %2903 = vmatmul.bf16.gmra.mxu0 %v2672
    %v2904 = vpop.f32.mrf.mxu0
    %v2905 = vadd.f32 %v2892, %v2904
    %v2906 = vpop.f32.mrf.mxu0
    %2907 = vdwg.mxu0
    %v2908 = vtanh.pop %v2905
    %v2909 = vmul.f32 %v2908, 2.0
    %2910 = vst [vmem:[#allocation16] sm:$0x3] %v2909
    // Predicated region
    $region78: #{tpu_custom_call.1} parent=1 // pred_check
      _
    $region79: #{tpu_custom_call.1} parent=1 // pred_check_branch
      %2912 = sbr.rel (0) target = $region81
    $region80: #{tpu_custom_call.1} parent=1 // pred_region
      %2914 = vsyncadd [#allocation4], 0
      %s2916 = sshll.u32 [#allocation16], 4
      %s2917 = int_to_ptr.vmem [resolvable:$true] %s2916
      %s2918 = sshll.u32 %s11, 4
      %s2919 = int_to_ptr.hbm [resolvable:$true] %s2918
      %2921 = dma.vmem_to_hbm [thread:$0]  %s2917, 32, %s2919, [#allocation4]
    $region81: #{tpu_custom_call.1} parent=1 // pred_fallthru
      _
    // Predicated region
    $region82: #{tpu_custom_call.1} parent=1 // pred_check
      _
    $region83: #{tpu_custom_call.1} parent=1 // pred_check_branch
      %2923 = sbr.rel (0) target = $region85
    $region84: #{tpu_custom_call.1} parent=1 // pred_region
      %2925 = dma.done [#allocation4], 32
    $region85: #{tpu_custom_call.1} parent=1 // pred_fallthru
      _
    %2926 = vsyncpa [#allocation3], 1
    %2927 = vsyncpa [#allocation6], 1
    %2928 = vsyncpa [#allocation9], 1
    %2929 = vsyncpa [#allocation12], 1
    %2930 = vsyncpa [#allocation15], 1
    %2931 = vsyncpa [#allocation4], 1

</llo_original>
